<compile_context>
chip_gen: v5e
topology: v5e:2x2
jax: 0.10.0
libtpu: 0.0.40
codegen_flags: <defaults>
</compile_context>

<pallas_src>
import functools

import jax
import jax.numpy as jnp
from jax.experimental import pallas as pl
from jax.experimental.pallas import tpu as pltpu


# ---------------- architecture constants (compile-time, NOT traced) ----------
C_IN = 3                                   # input image channels
C_CNN = 8                                  # conv output channels
IMG = 32                                   # input H = W
POOLED = 16                                # H = W after 2x2 maxpool
PATCH = 4                                  # ViT patch size on pooled feature map
N_TOKENS = (POOLED // PATCH) ** 2          # 16
PATCH_DIM = C_CNN * PATCH * PATCH          # 128
D_MODEL = 64
N_HEADS = 4
D_HEAD = D_MODEL // N_HEADS                # 16
MLP_DIM = 128
N_CLS = 10
KCONV = C_IN * 9                           # 27 (im2col contraction dim)
KPAD = 32                                  # zero-padded contraction dim


# ----------------------------------------------------------------------------
# Kernel 1: conv3x3(pad=1) + bias + ReLU + 2x2 maxpool (one batch per grid step)
# ----------------------------------------------------------------------------
def _conv_relu_pool_kernel(p_ref, w_ref, b_ref, o_ref):
    # p_ref: (KPAD, 4*256) im2col patches of one image, columns ordered
    #        (pool_parity, out_h, out_w).
    # w_ref: (C_CNN, KPAD)   b_ref: (C_CNN, 1)   o_ref: (C_CNN, 256)
    s = jnp.dot(w_ref[...], p_ref[...], preferred_element_type=jnp.float32)
    s = jnp.maximum(s + b_ref[...], 0.0)                      # conv bias + ReLU
    n = o_ref.shape[-1]                                       # 256 (lane-dense)
    pooled = jnp.maximum(jnp.maximum(s[:, 0 * n:1 * n], s[:, 1 * n:2 * n]),
                         jnp.maximum(s[:, 2 * n:3 * n], s[:, 3 * n:4 * n]))
    o_ref[...] = pooled.astype(o_ref.dtype)


# ----------------------------------------------------------------------------
# Kernel 2: the whole ViT block (one batch element per grid step)
# ----------------------------------------------------------------------------
def _layernorm(x, g, b, eps=1e-5):
    xf = x.astype(jnp.float32)
    mu = jnp.mean(xf, axis=-1, keepdims=True)
    var = jnp.mean((xf - mu) ** 2, axis=-1, keepdims=True)
    return (xf - mu) * jax.lax.rsqrt(var + eps) * g + b


def _vit_block_kernel(tok_ref, pos_ref, ew_ref, eb_ref, g1_ref, b1_ref,
                      wqkv_ref, bqkv_ref, wo_ref, bo_ref, g2_ref, b2_ref,
                      w1_ref, mb1_ref, w2_ref, mb2_ref, hw_ref, hb_ref,
                      o_ref, *, n_heads, scale):
    tok = tok_ref[...]                                         # (S, PATCH_DIM)

    # patch embedding + positional embedding
    emb = jnp.dot(tok, ew_ref[...], preferred_element_type=jnp.float32)
    emb = emb + eb_ref[...] + pos_ref[...]                     # (S, D)

    # --- attention sub-block (pre-LN, fused QKV) ---
    h = _layernorm(emb, g1_ref[...], b1_ref[...])
    qkv = jnp.dot(h, wqkv_ref[...], preferred_element_type=jnp.float32) + bqkv_ref[...]
    d = emb.shape[-1]
    dh = d // n_heads
    q, k, v = qkv[:, 0:d], qkv[:, d:2 * d], qkv[:, 2 * d:3 * d]

    wo = wo_ref[...]
    attn_proj = None
    for head in range(n_heads):                                # static unroll
        sl = slice(head * dh, (head + 1) * dh)
        qh, kh, vh = q[:, sl], k[:, sl], v[:, sl]
        s = jax.lax.dot_general(qh, kh, (((1,), (1,)), ((), ())),
                                preferred_element_type=jnp.float32) * scale
        m = jnp.max(s, axis=-1, keepdims=True)
        p = jnp.exp(s - m)
        l = jnp.sum(p, axis=-1, keepdims=True)
        oh = jnp.dot(p, vh, preferred_element_type=jnp.float32)
        oh = oh * pl.reciprocal(l, approx=True)
        # concat-over-heads followed by @wo == sum_h (o_h @ wo[h*dh:(h+1)*dh, :])
        contrib = jnp.dot(oh, wo[sl, :], preferred_element_type=jnp.float32)
        attn_proj = contrib if attn_proj is None else attn_proj + contrib
    attn_proj = attn_proj + bo_ref[...]
    x1 = emb + attn_proj

    # --- MLP sub-block (pre-LN) ---
    h2 = _layernorm(x1, g2_ref[...], b2_ref[...])
    mlp = jnp.dot(h2, w1_ref[...], preferred_element_type=jnp.float32) + mb1_ref[...]
    # TODO(synk): PyTorch nn.GELU default is exact erf; tanh-approx used here
    # (matches previous version and is guaranteed to lower on Mosaic).
    mlp = jax.nn.gelu(mlp, approximate=True)
    mlp = jnp.dot(mlp, w2_ref[...], preferred_element_type=jnp.float32) + mb2_ref[...]
    x2 = x1 + mlp

    # --- token mean-pool + classifier head ---
    pooled = jnp.mean(x2, axis=0, keepdims=True)               # (1, D)
    logits = jnp.dot(pooled, hw_ref[...], preferred_element_type=jnp.float32) + hb_ref[...]
    o_ref[...] = logits.reshape(o_ref.shape).astype(o_ref.dtype)


# ----------------------------------------------------------------------------
# JAX-side layout glue
# ----------------------------------------------------------------------------
def _im2col_pool_patches(x):
    """x: (B, C_IN, 32, 32) -> (KPAD, B*4*256) transposed patch matrix.

    Row index = c*9 + kh*3 + kw (matches conv_w.reshape(C_CNN, C_IN*9)).
    Col index = b*1024 + (ph*2+pw)*256 + out_h*16 + out_w, so the four 2x2
    maxpool candidates of each pooled pixel live in four contiguous 256-lane
    column blocks of one batch's 1024 columns.
    """
    B = x.shape[0]
    xpad = jnp.pad(x, ((0, 0), (0, 0), (1, 1), (1, 1)))        # (B, C, 34, 34)
    taps = []
    for kh in range(3):
        for kw in range(3):
            parities = [xpad[:, :, ph + kh:ph + kh + 2 * POOLED:2,
                               pw + kw:pw + kw + 2 * POOLED:2]
                        for ph in range(2) for pw in range(2)]
            taps.append(jnp.stack(parities, axis=0))           # (4, B, C, 16, 16)
    pm = jnp.stack(taps, axis=0)                               # (9, 4, B, C, 16, 16)
    pm = pm.transpose(3, 0, 2, 1, 4, 5)                        # (C, 9, B, 4, 16, 16)
    pm = pm.reshape(KCONV, B * 4 * POOLED * POOLED)
    return jnp.pad(pm, ((0, KPAD - KCONV), (0, 0)))            # zero-pad K 27 -> 32


def init_params(key):
    ks = jax.random.split(key, 10)

    def w(k, shape, fan_in):
        return jax.random.normal(k, shape, jnp.float32) / jnp.sqrt(float(fan_in))

    return {
        # SimpleCNN
        "conv_w": w(ks[0], (C_CNN, C_IN, 3, 3), C_IN * 9),  # PyTorch (Cout,Cin,kh,kw)
        "conv_b": jnp.zeros((C_CNN,), jnp.float32),
        # SimpleViT
        "embed_w": w(ks[1], (PATCH_DIM, D_MODEL), PATCH_DIM),
        "embed_b": jnp.zeros((D_MODEL,), jnp.float32),
        "pos": 0.02 * jax.random.normal(ks[2], (N_TOKENS, D_MODEL), jnp.float32),
        "ln1_g": jnp.ones((D_MODEL,), jnp.float32),
        "ln1_b": jnp.zeros((D_MODEL,), jnp.float32),
        "wq": w(ks[3], (D_MODEL, D_MODEL), D_MODEL), "bq": jnp.zeros((D_MODEL,), jnp.float32),
        "wk": w(ks[4], (D_MODEL, D_MODEL), D_MODEL), "bk": jnp.zeros((D_MODEL,), jnp.float32),
        "wv": w(ks[5], (D_MODEL, D_MODEL), D_MODEL), "bv": jnp.zeros((D_MODEL,), jnp.float32),
        "wo": w(ks[6], (D_MODEL, D_MODEL), D_MODEL), "bo": jnp.zeros((D_MODEL,), jnp.float32),
        "ln2_g": jnp.ones((D_MODEL,), jnp.float32),
        "ln2_b": jnp.zeros((D_MODEL,), jnp.float32),
        "mlp_w1": w(ks[7], (D_MODEL, MLP_DIM), D_MODEL),
        "mlp_b1": jnp.zeros((MLP_DIM,), jnp.float32),
        "mlp_w2": w(ks[8], (MLP_DIM, D_MODEL), MLP_DIM),
        "mlp_b2": jnp.zeros((D_MODEL,), jnp.float32),
        "head_w": w(ks[9], (D_MODEL, N_CLS), D_MODEL),
        "head_b": jnp.zeros((N_CLS,), jnp.float32),
    }


def simple_composition_forward(params, x):
    """x: (B, 3, 32, 32) float32 -> logits (B, 10)."""
    B = x.shape[0]

    # ---------------- SimpleCNN: conv + ReLU + maxpool (one fused kernel) ----
    patches = _im2col_pool_patches(x)                          # (32, B*1024)
    w_mat = jnp.pad(params["conv_w"].reshape(C_CNN, KCONV),
                    ((0, 0), (0, KPAD - KCONV)))               # (8, 32)
    b_mat = params["conv_b"].reshape(C_CNN, 1)

    n_cols = 4 * POOLED * POOLED                               # 1024 per batch
    n_out = POOLED * POOLED                                    # 256 per batch
    feat = pl.pallas_call(
        _conv_relu_pool_kernel,
        grid=(B,),
        in_specs=[
            pl.BlockSpec((KPAD, n_cols), lambda i: (0, i)),
            pl.BlockSpec((C_CNN, KPAD), lambda i: (0, 0)),
            pl.BlockSpec((C_CNN, 1), lambda i: (0, 0)),
        ],
        out_specs=pl.BlockSpec((C_CNN, n_out), lambda i: (0, i)),
        out_shape=jax.ShapeDtypeStruct((C_CNN, B * n_out), x.dtype),
        compiler_params=pltpu.CompilerParams(
            dimension_semantics=("parallel",)),
    )(patches, w_mat, b_mat)                                   # (8, B*256) lane-dense

    feat = feat.reshape(C_CNN, B, POOLED, POOLED).transpose(1, 0, 2, 3)  # (B,8,16,16)

    # ---------------- 4x4 patchify -> token matrix (pure layout) -------------
    tok = feat.reshape(B, C_CNN, POOLED // PATCH, PATCH, POOLED // PATCH, PATCH)
    tok = tok.transpose(0, 2, 4, 1, 3, 5).reshape(B * N_TOKENS, PATCH_DIM)

    # fused QKV weight: one (D, 3D) matmul instead of three launches
    wqkv = jnp.concatenate([params["wq"], params["wk"], params["wv"]], axis=1)
    bqkv = jnp.concatenate([params["bq"], params["bk"], params["bv"]])

    r = lambda a: a.reshape(1, -1)
    logits = pl.pallas_call(
        functools.partial(_vit_block_kernel, n_heads=N_HEADS,
                          scale=1.0 / float(D_HEAD) ** 0.5),
        grid=(B,),
        in_specs=[
            pl.BlockSpec((N_TOKENS, PATCH_DIM), lambda i: (i, 0)),     # tokens
            pl.BlockSpec((N_TOKENS, D_MODEL), lambda i: (0, 0)),       # pos emb
            pl.BlockSpec((PATCH_DIM, D_MODEL), lambda i: (0, 0)),      # embed_w
            pl.BlockSpec((1, D_MODEL), lambda i: (0, 0)),              # embed_b
            pl.BlockSpec((1, D_MODEL), lambda i: (0, 0)),              # ln1_g
            pl.BlockSpec((1, D_MODEL), lambda i: (0, 0)),              # ln1_b
            pl.BlockSpec((D_MODEL, 3 * D_MODEL), lambda i: (0, 0)),    # wqkv
            pl.BlockSpec((1, 3 * D_MODEL), lambda i: (0, 0)),          # bqkv
            pl.BlockSpec((D_MODEL, D_MODEL), lambda i: (0, 0)),        # wo
            pl.BlockSpec((1, D_MODEL), lambda i: (0, 0)),              # bo
            pl.BlockSpec((1, D_MODEL), lambda i: (0, 0)),              # ln2_g
            pl.BlockSpec((1, D_MODEL), lambda i: (0, 0)),              # ln2_b
            pl.BlockSpec((D_MODEL, MLP_DIM), lambda i: (0, 0)),        # mlp_w1
            pl.BlockSpec((1, MLP_DIM), lambda i: (0, 0)),              # mlp_b1
            pl.BlockSpec((MLP_DIM, D_MODEL), lambda i: (0, 0)),        # mlp_w2
            pl.BlockSpec((1, D_MODEL), lambda i: (0, 0)),              # mlp_b2
            pl.BlockSpec((D_MODEL, N_CLS), lambda i: (0, 0)),          # head_w
            pl.BlockSpec((1, N_CLS), lambda i: (0, 0)),                # head_b
        ],
        out_specs=pl.BlockSpec((1, 1, N_CLS), lambda i: (i, 0, 0)),
        out_shape=jax.ShapeDtypeStruct((B, 1, N_CLS), x.dtype),
        compiler_params=pltpu.CompilerParams(
            dimension_semantics=("parallel",)),
    )(tok, params["pos"],
      params["embed_w"], r(params["embed_b"]),
      r(params["ln1_g"]), r(params["ln1_b"]),
      wqkv, r(bqkv),
      params["wo"], r(params["bo"]),
      r(params["ln2_g"]), r(params["ln2_b"]),
      params["mlp_w1"], r(params["mlp_b1"]),
      params["mlp_w2"], r(params["mlp_b2"]),
      params["head_w"], r(params["head_b"]))

    return logits.reshape(B, N_CLS)


if __name__ == "__main__":
    key = jax.random.PRNGKey(0)
    k_param, k_x = jax.random.split(key)
    params = init_params(k_param)
    x = jax.random.normal(k_x, (2, 3, 32, 32), jnp.float32)    # (batch, 3, 32, 32)

    logits = jax.jit(simple_composition_forward)(params, x)
    jax.block_until_ready(logits)
    assert logits.shape == (2, 10), logits.shape
    print("KERNEL_OK")
</pallas_src>

<mosaic_0001>
module attributes {stable_mosaic.version = 11 : i64} {
  func.func @_conv_relu_pool_kernel(%arg0: i32, %arg1: memref<32x1024xf32, #tpu.memory_space<vmem>>, %arg2: memref<8x32xf32, #tpu.memory_space<vmem>>, %arg3: memref<8x1xf32, #tpu.memory_space<vmem>>, %arg4: memref<8x256xf32, #tpu.memory_space<vmem>>) attributes {dimension_semantics = [#tpu.dimension_semantics<parallel>], iteration_bounds = array<i64: 2>, scalar_prefetch = 0 : i64, scratch_operands = 0 : i64, tpu.core_type = #tpu.core_type<tc>, window_params = [{transform_indices = @transform_0, window_bounds = array<i64: 32, 1024>}, {pipeline_mode = #tpu.pipeline_mode<synchronous>, transform_indices = @transform_1, window_bounds = array<i64: 8, 32>}, {pipeline_mode = #tpu.pipeline_mode<synchronous>, transform_indices = @transform_2, window_bounds = array<i64: 8, 1>}, {transform_indices = @transform_3, window_bounds = array<i64: 8, 256>}]} {
    %c0 = arith.constant 0 : index
    %c0_0 = arith.constant 0 : index
    %0 = vector.load %arg2[%c0, %c0_0] : memref<8x32xf32, #tpu.memory_space<vmem>>, vector<8x32xf32>
    %c0_1 = arith.constant 0 : index
    %c0_2 = arith.constant 0 : index
    %1 = vector.load %arg1[%c0_1, %c0_2] : memref<32x1024xf32, #tpu.memory_space<vmem>>, vector<32x1024xf32>
    %cst = arith.constant dense<0.000000e+00> : vector<8x1024xf32>
    %2 = tpu.matmul %0, %1, %cst {dimension_numbers = #tpu.dot_dimension_numbers<[1], [0], [0], [1], [0, 0, 1, 1], [], []>} : vector<8x32xf32>, vector<32x1024xf32>, vector<8x1024xf32> -> vector<8x1024xf32>
    %c0_3 = arith.constant 0 : index
    %c0_4 = arith.constant 0 : index
    %3 = vector.load %arg3[%c0_3, %c0_4] : memref<8x1xf32, #tpu.memory_space<vmem>>, vector<8x1xf32>
    %4 = vector.broadcast %3 : vector<8x1xf32> to vector<8x1024xf32>
    %5 = arith.addf %2, %4 : vector<8x1024xf32>
    %cst_5 = arith.constant 0.000000e+00 : f32
    %6 = vector.broadcast %cst_5 : f32 to vector<8x1024xf32>
    %7 = arith.maximumf %5, %6 : vector<8x1024xf32>
    %8 = vector.extract_strided_slice %7 {offsets = [0, 0], sizes = [8, 256], strides = [1, 1]} : vector<8x1024xf32> to vector<8x256xf32>
    %9 = vector.extract_strided_slice %7 {offsets = [0, 256], sizes = [8, 256], strides = [1, 1]} : vector<8x1024xf32> to vector<8x256xf32>
    %10 = arith.maximumf %8, %9 : vector<8x256xf32>
    %11 = vector.extract_strided_slice %7 {offsets = [0, 512], sizes = [8, 256], strides = [1, 1]} : vector<8x1024xf32> to vector<8x256xf32>
    %12 = vector.extract_strided_slice %7 {offsets = [0, 768], sizes = [8, 256], strides = [1, 1]} : vector<8x1024xf32> to vector<8x256xf32>
    %13 = arith.maximumf %11, %12 : vector<8x256xf32>
    %14 = arith.maximumf %10, %13 : vector<8x256xf32>
    %c0_6 = arith.constant 0 : index
    %c0_7 = arith.constant 0 : index
    %15 = vector.load %arg4[%c0_6, %c0_7] : memref<8x256xf32, #tpu.memory_space<vmem>>, vector<8x256xf32>
    tpu.vector_store %arg4[%c0_6, %c0_7], %14 {strides = array<i32>} : memref<8x256xf32, #tpu.memory_space<vmem>>, vector<8x256xf32>,
    return
  }
  func.func @transform_0(%arg0: i32) -> (i32, i32) {
    %c0_i32 = arith.constant 0 : i32
    %c0_i32_0 = arith.constant 0 : i32
    return %c0_i32, %arg0 : i32, i32
  }
  func.func @transform_1(%arg0: i32) -> (i32, i32) {
    %c0_i32 = arith.constant 0 : i32
    %c0_i32_0 = arith.constant 0 : i32
    %c0_i32_1 = arith.constant 0 : i32
    return %c0_i32, %c0_i32_0 : i32, i32
  }
  func.func @transform_2(%arg0: i32) -> (i32, i32) {
    %c0_i32 = arith.constant 0 : i32
    %c0_i32_0 = arith.constant 0 : i32
    %c0_i32_1 = arith.constant 0 : i32
    return %c0_i32, %c0_i32_0 : i32, i32
  }
  func.func @transform_3(%arg0: i32) -> (i32, i32) {
    %c0_i32 = arith.constant 0 : i32
    %c0_i32_0 = arith.constant 0 : i32
    return %c0_i32, %arg0 : i32, i32
  }
}

module attributes {stable_mosaic.version = 11 : i64} {
  func.func @_vit_block_kernel(%arg0: i32, %arg1: memref<16x128xf32, #tpu.memory_space<vmem>>, %arg2: memref<16x64xf32, #tpu.memory_space<vmem>>, %arg3: memref<128x64xf32, #tpu.memory_space<vmem>>, %arg4: memref<1x64xf32, #tpu.memory_space<vmem>>, %arg5: memref<1x64xf32, #tpu.memory_space<vmem>>, %arg6: memref<1x64xf32, #tpu.memory_space<vmem>>, %arg7: memref<64x192xf32, #tpu.memory_space<vmem>>, %arg8: memref<1x192xf32, #tpu.memory_space<vmem>>, %arg9: memref<64x64xf32, #tpu.memory_space<vmem>>, %arg10: memref<1x64xf32, #tpu.memory_space<vmem>>, %arg11: memref<1x64xf32, #tpu.memory_space<vmem>>, %arg12: memref<1x64xf32, #tpu.memory_space<vmem>>, %arg13: memref<64x128xf32, #tpu.memory_space<vmem>>, %arg14: memref<1x128xf32, #tpu.memory_space<vmem>>, %arg15: memref<128x64xf32, #tpu.memory_space<vmem>>, %arg16: memref<1x64xf32, #tpu.memory_space<vmem>>, %arg17: memref<64x10xf32, #tpu.memory_space<vmem>>, %arg18: memref<1x10xf32, #tpu.memory_space<vmem>>, %arg19: memref<1x1x10xf32, #tpu.memory_space<vmem>>) attributes {dimension_semantics = [#tpu.dimension_semantics<parallel>], iteration_bounds = array<i64: 2>, scalar_prefetch = 0 : i64, scratch_operands = 0 : i64, tpu.core_type = #tpu.core_type<tc>, window_params = [{transform_indices = @transform_0, window_bounds = array<i64: 16, 128>}, {pipeline_mode = #tpu.pipeline_mode<synchronous>, transform_indices = @transform_1, window_bounds = array<i64: 16, 64>}, {pipeline_mode = #tpu.pipeline_mode<synchronous>, transform_indices = @transform_2, window_bounds = array<i64: 128, 64>}, {pipeline_mode = #tpu.pipeline_mode<synchronous>, transform_indices = @transform_3, window_bounds = array<i64: 1, 64>}, {pipeline_mode = #tpu.pipeline_mode<synchronous>, transform_indices = @transform_4, window_bounds = array<i64: 1, 64>}, {pipeline_mode = #tpu.pipeline_mode<synchronous>, transform_indices = @transform_5, window_bounds = array<i64: 1, 64>}, {pipeline_mode = #tpu.pipeline_mode<synchronous>, transform_indices = @transform_6, window_bounds = array<i64: 64, 192>}, {pipeline_mode = #tpu.pipeline_mode<synchronous>, transform_indices = @transform_7, window_bounds = array<i64: 1, 192>}, {pipeline_mode = #tpu.pipeline_mode<synchronous>, transform_indices = @transform_8, window_bounds = array<i64: 64, 64>}, {pipeline_mode = #tpu.pipeline_mode<synchronous>, transform_indices = @transform_9, window_bounds = array<i64: 1, 64>}, {pipeline_mode = #tpu.pipeline_mode<synchronous>, transform_indices = @transform_10, window_bounds = array<i64: 1, 64>}, {pipeline_mode = #tpu.pipeline_mode<synchronous>, transform_indices = @transform_11, window_bounds = array<i64: 1, 64>}, {pipeline_mode = #tpu.pipeline_mode<synchronous>, transform_indices = @transform_12, window_bounds = array<i64: 64, 128>}, {pipeline_mode = #tpu.pipeline_mode<synchronous>, transform_indices = @transform_13, window_bounds = array<i64: 1, 128>}, {pipeline_mode = #tpu.pipeline_mode<synchronous>, transform_indices = @transform_14, window_bounds = array<i64: 128, 64>}, {pipeline_mode = #tpu.pipeline_mode<synchronous>, transform_indices = @transform_15, window_bounds = array<i64: 1, 64>}, {pipeline_mode = #tpu.pipeline_mode<synchronous>, transform_indices = @transform_16, window_bounds = array<i64: 64, 10>}, {pipeline_mode = #tpu.pipeline_mode<synchronous>, transform_indices = @transform_17, window_bounds = array<i64: 1, 10>}, {transform_indices = @transform_18, window_bounds = array<i64: 1, 1, 10>}]} {
    %c0 = arith.constant 0 : index
    %c0_0 = arith.constant 0 : index
    %0 = vector.load %arg1[%c0, %c0_0] : memref<16x128xf32, #tpu.memory_space<vmem>>, vector<16x128xf32>
    %c0_1 = arith.constant 0 : index
    %c0_2 = arith.constant 0 : index
    %1 = vector.load %arg3[%c0_1, %c0_2] : memref<128x64xf32, #tpu.memory_space<vmem>>, vector<128x64xf32>
    %cst = arith.constant dense<0.000000e+00> : vector<16x64xf32>
    %2 = tpu.matmul %0, %1, %cst {dimension_numbers = #tpu.dot_dimension_numbers<[1], [0], [0], [1], [0, 0, 1, 1], [], []>} : vector<16x128xf32>, vector<128x64xf32>, vector<16x64xf32> -> vector<16x64xf32>
    %c0_3 = arith.constant 0 : index
    %c0_4 = arith.constant 0 : index
    %3 = vector.load %arg4[%c0_3, %c0_4] : memref<1x64xf32, #tpu.memory_space<vmem>>, vector<1x64xf32>
    %4 = vector.broadcast %3 : vector<1x64xf32> to vector<16x64xf32>
    %5 = arith.addf %2, %4 : vector<16x64xf32>
    %c0_5 = arith.constant 0 : index
    %c0_6 = arith.constant 0 : index
    %6 = vector.load %arg2[%c0_5, %c0_6] : memref<16x64xf32, #tpu.memory_space<vmem>>, vector<16x64xf32>
    %7 = arith.addf %5, %6 : vector<16x64xf32>
    %c0_7 = arith.constant 0 : index
    %c0_8 = arith.constant 0 : index
    %8 = vector.load %arg5[%c0_7, %c0_8] : memref<1x64xf32, #tpu.memory_space<vmem>>, vector<1x64xf32>
    %c0_9 = arith.constant 0 : index
    %c0_10 = arith.constant 0 : index
    %9 = vector.load %arg6[%c0_9, %c0_10] : memref<1x64xf32, #tpu.memory_space<vmem>>, vector<1x64xf32>
    %cst_11 = arith.constant dense<0.000000e+00> : vector<16xf32>
    %10 = vector.multi_reduction <add>, %7, %cst_11 [1] : vector<16x64xf32> to vector<16xf32>
    %11 = vector.shape_cast %10 : vector<16xf32> to vector<16x1xf32>
    %cst_12 = arith.constant 6.400000e+01 : f32
    %12 = vector.broadcast %cst_12 : f32 to vector<16x1xf32>
    %13 = arith.divf %11, %12 : vector<16x1xf32>
    %14 = vector.broadcast %13 : vector<16x1xf32> to vector<16x64xf32>
    %15 = arith.subf %7, %14 : vector<16x64xf32>
    %16 = arith.mulf %15, %15 : vector<16x64xf32>
    %cst_13 = arith.constant dense<0.000000e+00> : vector<16xf32>
    %17 = vector.multi_reduction <add>, %16, %cst_13 [1] : vector<16x64xf32> to vector<16xf32>
    %18 = vector.shape_cast %17 : vector<16xf32> to vector<16x1xf32>
    %cst_14 = arith.constant 6.400000e+01 : f32
    %19 = vector.broadcast %cst_14 : f32 to vector<16x1xf32>
    %20 = arith.divf %18, %19 : vector<16x1xf32>
    %21 = vector.broadcast %13 : vector<16x1xf32> to vector<16x64xf32>
    %22 = arith.subf %7, %21 : vector<16x64xf32>
    %cst_15 = arith.constant 9.99999974E-6 : f32
    %23 = vector.broadcast %cst_15 : f32 to vector<16x1xf32>
    %24 = arith.addf %20, %23 : vector<16x1xf32>
    %25 = math.rsqrt %24 : vector<16x1xf32>
    %26 = vector.broadcast %25 : vector<16x1xf32> to vector<16x64xf32>
    %27 = arith.mulf %22, %26 : vector<16x64xf32>
    %28 = vector.broadcast %8 : vector<1x64xf32> to vector<16x64xf32>
    %29 = arith.mulf %27, %28 : vector<16x64xf32>
    %30 = vector.broadcast %9 : vector<1x64xf32> to vector<16x64xf32>
    %31 = arith.addf %29, %30 : vector<16x64xf32>
    %c0_16 = arith.constant 0 : index
    %c0_17 = arith.constant 0 : index
    %32 = vector.load %arg7[%c0_16, %c0_17] : memref<64x192xf32, #tpu.memory_space<vmem>>, vector<64x192xf32>
    %cst_18 = arith.constant dense<0.000000e+00> : vector<16x192xf32>
    %33 = tpu.matmul %31, %32, %cst_18 {dimension_numbers = #tpu.dot_dimension_numbers<[1], [0], [0], [1], [0, 0, 1, 1], [], []>} : vector<16x64xf32>, vector<64x192xf32>, vector<16x192xf32> -> vector<16x192xf32>
    %c0_19 = arith.constant 0 : index
    %c0_20 = arith.constant 0 : index
    %34 = vector.load %arg8[%c0_19, %c0_20] : memref<1x192xf32, #tpu.memory_space<vmem>>, vector<1x192xf32>
    %35 = vector.broadcast %34 : vector<1x192xf32> to vector<16x192xf32>
    %36 = arith.addf %33, %35 : vector<16x192xf32>
    %37 = vector.extract_strided_slice %36 {offsets = [0, 0], sizes = [16, 64], strides = [1, 1]} : vector<16x192xf32> to vector<16x64xf32>
    %38 = vector.extract_strided_slice %36 {offsets = [0, 64], sizes = [16, 64], strides = [1, 1]} : vector<16x192xf32> to vector<16x64xf32>
    %39 = vector.extract_strided_slice %36 {offsets = [0, 128], sizes = [16, 64], strides = [1, 1]} : vector<16x192xf32> to vector<16x64xf32>
    %c0_21 = arith.constant 0 : index
    %c0_22 = arith.constant 0 : index
    %40 = vector.load %arg9[%c0_21, %c0_22] : memref<64x64xf32, #tpu.memory_space<vmem>>, vector<64x64xf32>
    %41 = vector.extract_strided_slice %37 {offsets = [0, 0], sizes = [16, 16], strides = [1, 1]} : vector<16x64xf32> to vector<16x16xf32>
    %42 = vector.extract_strided_slice %38 {offsets = [0, 0], sizes = [16, 16], strides = [1, 1]} : vector<16x64xf32> to vector<16x16xf32>
    %43 = vector.extract_strided_slice %39 {offsets = [0, 0], sizes = [16, 16], strides = [1, 1]} : vector<16x64xf32> to vector<16x16xf32>
    %cst_23 = arith.constant dense<0.000000e+00> : vector<16x16xf32>
    %44 = tpu.matmul %41, %42, %cst_23 {dimension_numbers = #tpu.dot_dimension_numbers<[1], [1], [0], [0], [0, 0, 1, 0], [], []>} : vector<16x16xf32>, vector<16x16xf32>, vector<16x16xf32> -> vector<16x16xf32>
    %cst_24 = arith.constant 2.500000e-01 : f32
    %45 = vector.broadcast %cst_24 : f32 to vector<16x16xf32>
    %46 = arith.mulf %44, %45 : vector<16x16xf32>
    %cst_25 = arith.constant dense<0xFF800000> : vector<16xf32>
    %47 = vector.multi_reduction <maximumf>, %46, %cst_25 [1] : vector<16x16xf32> to vector<16xf32>
    %48 = vector.shape_cast %47 : vector<16xf32> to vector<16x1xf32>
    %49 = vector.broadcast %48 : vector<16x1xf32> to vector<16x16xf32>
    %50 = arith.subf %46, %49 : vector<16x16xf32>
    %51 = math.exp %50 : vector<16x16xf32>
    %cst_26 = arith.constant dense<0.000000e+00> : vector<16xf32>
    %52 = vector.multi_reduction <add>, %51, %cst_26 [1] : vector<16x16xf32> to vector<16xf32>
    %53 = vector.shape_cast %52 : vector<16xf32> to vector<16x1xf32>
    %cst_27 = arith.constant dense<0.000000e+00> : vector<16x16xf32>
    %54 = tpu.matmul %51, %43, %cst_27 {dimension_numbers = #tpu.dot_dimension_numbers<[1], [0], [0], [1], [0, 0, 1, 1], [], []>} : vector<16x16xf32>, vector<16x16xf32>, vector<16x16xf32> -> vector<16x16xf32>
    %55 = tpu.reciprocal %53 {approx = true} : vector<16x1xf32> -> vector<16x1xf32>
    %56 = vector.broadcast %55 : vector<16x1xf32> to vector<16x16xf32>
    %57 = arith.mulf %54, %56 : vector<16x16xf32>
    %58 = vector.extract_strided_slice %40 {offsets = [0, 0], sizes = [16, 64], strides = [1, 1]} : vector<64x64xf32> to vector<16x64xf32>
    %cst_28 = arith.constant dense<0.000000e+00> : vector<16x64xf32>
    %59 = tpu.matmul %57, %58, %cst_28 {dimension_numbers = #tpu.dot_dimension_numbers<[1], [0], [0], [1], [0, 0, 1, 1], [], []>} : vector<16x16xf32>, vector<16x64xf32>, vector<16x64xf32> -> vector<16x64xf32>
    %60 = vector.extract_strided_slice %37 {offsets = [0, 16], sizes = [16, 16], strides = [1, 1]} : vector<16x64xf32> to vector<16x16xf32>
    %61 = vector.extract_strided_slice %38 {offsets = [0, 16], sizes = [16, 16], strides = [1, 1]} : vector<16x64xf32> to vector<16x16xf32>
    %62 = vector.extract_strided_slice %39 {offsets = [0, 16], sizes = [16, 16], strides = [1, 1]} : vector<16x64xf32> to vector<16x16xf32>
    %cst_29 = arith.constant dense<0.000000e+00> : vector<16x16xf32>
    %63 = tpu.matmul %60, %61, %cst_29 {dimension_numbers = #tpu.dot_dimension_numbers<[1], [1], [0], [0], [0, 0, 1, 0], [], []>} : vector<16x16xf32>, vector<16x16xf32>, vector<16x16xf32> -> vector<16x16xf32>
    %cst_30 = arith.constant 2.500000e-01 : f32
    %64 = vector.broadcast %cst_30 : f32 to vector<16x16xf32>
    %65 = arith.mulf %63, %64 : vector<16x16xf32>
    %cst_31 = arith.constant dense<0xFF800000> : vector<16xf32>
    %66 = vector.multi_reduction <maximumf>, %65, %cst_31 [1] : vector<16x16xf32> to vector<16xf32>
    %67 = vector.shape_cast %66 : vector<16xf32> to vector<16x1xf32>
    %68 = vector.broadcast %67 : vector<16x1xf32> to vector<16x16xf32>
    %69 = arith.subf %65, %68 : vector<16x16xf32>
    %70 = math.exp %69 : vector<16x16xf32>
    %cst_32 = arith.constant dense<0.000000e+00> : vector<16xf32>
    %71 = vector.multi_reduction <add>, %70, %cst_32 [1] : vector<16x16xf32> to vector<16xf32>
    %72 = vector.shape_cast %71 : vector<16xf32> to vector<16x1xf32>
    %cst_33 = arith.constant dense<0.000000e+00> : vector<16x16xf32>
    %73 = tpu.matmul %70, %62, %cst_33 {dimension_numbers = #tpu.dot_dimension_numbers<[1], [0], [0], [1], [0, 0, 1, 1], [], []>} : vector<16x16xf32>, vector<16x16xf32>, vector<16x16xf32> -> vector<16x16xf32>
    %74 = tpu.reciprocal %72 {approx = true} : vector<16x1xf32> -> vector<16x1xf32>
    %75 = vector.broadcast %74 : vector<16x1xf32> to vector<16x16xf32>
    %76 = arith.mulf %73, %75 : vector<16x16xf32>
    %77 = vector.extract_strided_slice %40 {offsets = [16, 0], sizes = [16, 64], strides = [1, 1]} : vector<64x64xf32> to vector<16x64xf32>
    %cst_34 = arith.constant dense<0.000000e+00> : vector<16x64xf32>
    %78 = tpu.matmul %76, %77, %cst_34 {dimension_numbers = #tpu.dot_dimension_numbers<[1], [0], [0], [1], [0, 0, 1, 1], [], []>} : vector<16x16xf32>, vector<16x64xf32>, vector<16x64xf32> -> vector<16x64xf32>
    %79 = arith.addf %59, %78 : vector<16x64xf32>
    %80 = vector.extract_strided_slice %37 {offsets = [0, 32], sizes = [16, 16], strides = [1, 1]} : vector<16x64xf32> to vector<16x16xf32>
    %81 = vector.extract_strided_slice %38 {offsets = [0, 32], sizes = [16, 16], strides = [1, 1]} : vector<16x64xf32> to vector<16x16xf32>
    %82 = vector.extract_strided_slice %39 {offsets = [0, 32], sizes = [16, 16], strides = [1, 1]} : vector<16x64xf32> to vector<16x16xf32>
    %cst_35 = arith.constant dense<0.000000e+00> : vector<16x16xf32>
    %83 = tpu.matmul %80, %81, %cst_35 {dimension_numbers = #tpu.dot_dimension_numbers<[1], [1], [0], [0], [0, 0, 1, 0], [], []>} : vector<16x16xf32>, vector<16x16xf32>, vector<16x16xf32> -> vector<16x16xf32>
    %cst_36 = arith.constant 2.500000e-01 : f32
    %84 = vector.broadcast %cst_36 : f32 to vector<16x16xf32>
    %85 = arith.mulf %83, %84 : vector<16x16xf32>
    %cst_37 = arith.constant dense<0xFF800000> : vector<16xf32>
    %86 = vector.multi_reduction <maximumf>, %85, %cst_37 [1] : vector<16x16xf32> to vector<16xf32>
    %87 = vector.shape_cast %86 : vector<16xf32> to vector<16x1xf32>
    %88 = vector.broadcast %87 : vector<16x1xf32> to vector<16x16xf32>
    %89 = arith.subf %85, %88 : vector<16x16xf32>
    %90 = math.exp %89 : vector<16x16xf32>
    %cst_38 = arith.constant dense<0.000000e+00> : vector<16xf32>
    %91 = vector.multi_reduction <add>, %90, %cst_38 [1] : vector<16x16xf32> to vector<16xf32>
    %92 = vector.shape_cast %91 : vector<16xf32> to vector<16x1xf32>
    %cst_39 = arith.constant dense<0.000000e+00> : vector<16x16xf32>
    %93 = tpu.matmul %90, %82, %cst_39 {dimension_numbers = #tpu.dot_dimension_numbers<[1], [0], [0], [1], [0, 0, 1, 1], [], []>} : vector<16x16xf32>, vector<16x16xf32>, vector<16x16xf32> -> vector<16x16xf32>
    %94 = tpu.reciprocal %92 {approx = true} : vector<16x1xf32> -> vector<16x1xf32>
    %95 = vector.broadcast %94 : vector<16x1xf32> to vector<16x16xf32>
    %96 = arith.mulf %93, %95 : vector<16x16xf32>
    %97 = vector.extract_strided_slice %40 {offsets = [32, 0], sizes = [16, 64], strides = [1, 1]} : vector<64x64xf32> to vector<16x64xf32>
    %cst_40 = arith.constant dense<0.000000e+00> : vector<16x64xf32>
    %98 = tpu.matmul %96, %97, %cst_40 {dimension_numbers = #tpu.dot_dimension_numbers<[1], [0], [0], [1], [0, 0, 1, 1], [], []>} : vector<16x16xf32>, vector<16x64xf32>, vector<16x64xf32> -> vector<16x64xf32>
    %99 = arith.addf %79, %98 : vector<16x64xf32>
    %100 = vector.extract_strided_slice %37 {offsets = [0, 48], sizes = [16, 16], strides = [1, 1]} : vector<16x64xf32> to vector<16x16xf32>
    %101 = vector.extract_strided_slice %38 {offsets = [0, 48], sizes = [16, 16], strides = [1, 1]} : vector<16x64xf32> to vector<16x16xf32>
    %102 = vector.extract_strided_slice %39 {offsets = [0, 48], sizes = [16, 16], strides = [1, 1]} : vector<16x64xf32> to vector<16x16xf32>
    %cst_41 = arith.constant dense<0.000000e+00> : vector<16x16xf32>
    %103 = tpu.matmul %100, %101, %cst_41 {dimension_numbers = #tpu.dot_dimension_numbers<[1], [1], [0], [0], [0, 0, 1, 0], [], []>} : vector<16x16xf32>, vector<16x16xf32>, vector<16x16xf32> -> vector<16x16xf32>
    %cst_42 = arith.constant 2.500000e-01 : f32
    %104 = vector.broadcast %cst_42 : f32 to vector<16x16xf32>
    %105 = arith.mulf %103, %104 : vector<16x16xf32>
    %cst_43 = arith.constant dense<0xFF800000> : vector<16xf32>
    %106 = vector.multi_reduction <maximumf>, %105, %cst_43 [1] : vector<16x16xf32> to vector<16xf32>
    %107 = vector.shape_cast %106 : vector<16xf32> to vector<16x1xf32>
    %108 = vector.broadcast %107 : vector<16x1xf32> to vector<16x16xf32>
    %109 = arith.subf %105, %108 : vector<16x16xf32>
    %110 = math.exp %109 : vector<16x16xf32>
    %cst_44 = arith.constant dense<0.000000e+00> : vector<16xf32>
    %111 = vector.multi_reduction <add>, %110, %cst_44 [1] : vector<16x16xf32> to vector<16xf32>
    %112 = vector.shape_cast %111 : vector<16xf32> to vector<16x1xf32>
    %cst_45 = arith.constant dense<0.000000e+00> : vector<16x16xf32>
    %113 = tpu.matmul %110, %102, %cst_45 {dimension_numbers = #tpu.dot_dimension_numbers<[1], [0], [0], [1], [0, 0, 1, 1], [], []>} : vector<16x16xf32>, vector<16x16xf32>, vector<16x16xf32> -> vector<16x16xf32>
    %114 = tpu.reciprocal %112 {approx = true} : vector<16x1xf32> -> vector<16x1xf32>
    %115 = vector.broadcast %114 : vector<16x1xf32> to vector<16x16xf32>
    %116 = arith.mulf %113, %115 : vector<16x16xf32>
    %117 = vector.extract_strided_slice %40 {offsets = [48, 0], sizes = [16, 64], strides = [1, 1]} : vector<64x64xf32> to vector<16x64xf32>
    %cst_46 = arith.constant dense<0.000000e+00> : vector<16x64xf32>
    %118 = tpu.matmul %116, %117, %cst_46 {dimension_numbers = #tpu.dot_dimension_numbers<[1], [0], [0], [1], [0, 0, 1, 1], [], []>} : vector<16x16xf32>, vector<16x64xf32>, vector<16x64xf32> -> vector<16x64xf32>
    %119 = arith.addf %99, %118 : vector<16x64xf32>
    %c0_47 = arith.constant 0 : index
    %c0_48 = arith.constant 0 : index
    %120 = vector.load %arg10[%c0_47, %c0_48] : memref<1x64xf32, #tpu.memory_space<vmem>>, vector<1x64xf32>
    %121 = vector.broadcast %120 : vector<1x64xf32> to vector<16x64xf32>
    %122 = arith.addf %119, %121 : vector<16x64xf32>
    %123 = arith.addf %7, %122 : vector<16x64xf32>
    %c0_49 = arith.constant 0 : index
    %c0_50 = arith.constant 0 : index
    %124 = vector.load %arg11[%c0_49, %c0_50] : memref<1x64xf32, #tpu.memory_space<vmem>>, vector<1x64xf32>
    %c0_51 = arith.constant 0 : index
    %c0_52 = arith.constant 0 : index
    %125 = vector.load %arg12[%c0_51, %c0_52] : memref<1x64xf32, #tpu.memory_space<vmem>>, vector<1x64xf32>
    %cst_53 = arith.constant dense<0.000000e+00> : vector<16xf32>
    %126 = vector.multi_reduction <add>, %123, %cst_53 [1] : vector<16x64xf32> to vector<16xf32>
    %127 = vector.shape_cast %126 : vector<16xf32> to vector<16x1xf32>
    %cst_54 = arith.constant 6.400000e+01 : f32
    %128 = vector.broadcast %cst_54 : f32 to vector<16x1xf32>
    %129 = arith.divf %127, %128 : vector<16x1xf32>
    %130 = vector.broadcast %129 : vector<16x1xf32> to vector<16x64xf32>
    %131 = arith.subf %123, %130 : vector<16x64xf32>
    %132 = arith.mulf %131, %131 : vector<16x64xf32>
    %cst_55 = arith.constant dense<0.000000e+00> : vector<16xf32>
    %133 = vector.multi_reduction <add>, %132, %cst_55 [1] : vector<16x64xf32> to vector<16xf32>
    %134 = vector.shape_cast %133 : vector<16xf32> to vector<16x1xf32>
    %cst_56 = arith.constant 6.400000e+01 : f32
    %135 = vector.broadcast %cst_56 : f32 to vector<16x1xf32>
    %136 = arith.divf %134, %135 : vector<16x1xf32>
    %137 = vector.broadcast %129 : vector<16x1xf32> to vector<16x64xf32>
    %138 = arith.subf %123, %137 : vector<16x64xf32>
    %cst_57 = arith.constant 9.99999974E-6 : f32
    %139 = vector.broadcast %cst_57 : f32 to vector<16x1xf32>
    %140 = arith.addf %136, %139 : vector<16x1xf32>
    %141 = math.rsqrt %140 : vector<16x1xf32>
    %142 = vector.broadcast %141 : vector<16x1xf32> to vector<16x64xf32>
    %143 = arith.mulf %138, %142 : vector<16x64xf32>
    %144 = vector.broadcast %124 : vector<1x64xf32> to vector<16x64xf32>
    %145 = arith.mulf %143, %144 : vector<16x64xf32>
    %146 = vector.broadcast %125 : vector<1x64xf32> to vector<16x64xf32>
    %147 = arith.addf %145, %146 : vector<16x64xf32>
    %c0_58 = arith.constant 0 : index
    %c0_59 = arith.constant 0 : index
    %148 = vector.load %arg13[%c0_58, %c0_59] : memref<64x128xf32, #tpu.memory_space<vmem>>, vector<64x128xf32>
    %cst_60 = arith.constant dense<0.000000e+00> : vector<16x128xf32>
    %149 = tpu.matmul %147, %148, %cst_60 {dimension_numbers = #tpu.dot_dimension_numbers<[1], [0], [0], [1], [0, 0, 1, 1], [], []>} : vector<16x64xf32>, vector<64x128xf32>, vector<16x128xf32> -> vector<16x128xf32>
    %c0_61 = arith.constant 0 : index
    %c0_62 = arith.constant 0 : index
    %150 = vector.load %arg14[%c0_61, %c0_62] : memref<1x128xf32, #tpu.memory_space<vmem>>, vector<1x128xf32>
    %151 = vector.broadcast %150 : vector<1x128xf32> to vector<16x128xf32>
    %152 = arith.addf %149, %151 : vector<16x128xf32>
    %153 = arith.mulf %152, %152 : vector<16x128xf32>
    %154 = arith.mulf %152, %153 : vector<16x128xf32>
    %cst_63 = arith.constant 4.471500e-02 : f32
    %155 = vector.broadcast %cst_63 : f32 to vector<16x128xf32>
    %156 = arith.mulf %155, %154 : vector<16x128xf32>
    %157 = arith.addf %152, %156 : vector<16x128xf32>
    %cst_64 = arith.constant 0.797884583 : f32
    %158 = vector.broadcast %cst_64 : f32 to vector<16x128xf32>
    %159 = arith.mulf %158, %157 : vector<16x128xf32>
    %160 = math.tanh %159 : vector<16x128xf32>
    %cst_65 = arith.constant 1.000000e+00 : f32
    %161 = vector.broadcast %cst_65 : f32 to vector<16x128xf32>
    %162 = arith.addf %161, %160 : vector<16x128xf32>
    %cst_66 = arith.constant 5.000000e-01 : f32
    %163 = vector.broadcast %cst_66 : f32 to vector<16x128xf32>
    %164 = arith.mulf %163, %162 : vector<16x128xf32>
    %165 = arith.mulf %152, %164 : vector<16x128xf32>
    %c0_67 = arith.constant 0 : index
    %c0_68 = arith.constant 0 : index
    %166 = vector.load %arg15[%c0_67, %c0_68] : memref<128x64xf32, #tpu.memory_space<vmem>>, vector<128x64xf32>
    %cst_69 = arith.constant dense<0.000000e+00> : vector<16x64xf32>
    %167 = tpu.matmul %165, %166, %cst_69 {dimension_numbers = #tpu.dot_dimension_numbers<[1], [0], [0], [1], [0, 0, 1, 1], [], []>} : vector<16x128xf32>, vector<128x64xf32>, vector<16x64xf32> -> vector<16x64xf32>
    %c0_70 = arith.constant 0 : index
    %c0_71 = arith.constant 0 : index
    %168 = vector.load %arg16[%c0_70, %c0_71] : memref<1x64xf32, #tpu.memory_space<vmem>>, vector<1x64xf32>
    %169 = vector.broadcast %168 : vector<1x64xf32> to vector<16x64xf32>
    %170 = arith.addf %167, %169 : vector<16x64xf32>
    %171 = arith.addf %123, %170 : vector<16x64xf32>
    %cst_72 = arith.constant dense<0.000000e+00> : vector<64xf32>
    %172 = vector.multi_reduction <add>, %171, %cst_72 [0] : vector<16x64xf32> to vector<64xf32>
    %173 = vector.shape_cast %172 : vector<64xf32> to vector<1x64xf32>
    %cst_73 = arith.constant 1.600000e+01 : f32
    %174 = vector.broadcast %cst_73 : f32 to vector<1x64xf32>
    %175 = arith.divf %173, %174 : vector<1x64xf32>
    %c0_74 = arith.constant 0 : index
    %c0_75 = arith.constant 0 : index
    %176 = vector.load %arg17[%c0_74, %c0_75] : memref<64x10xf32, #tpu.memory_space<vmem>>, vector<64x10xf32>
    %cst_76 = arith.constant dense<0.000000e+00> : vector<1x10xf32>
    %177 = tpu.matmul %175, %176, %cst_76 {dimension_numbers = #tpu.dot_dimension_numbers<[1], [0], [0], [1], [0, 0, 1, 1], [], []>} : vector<1x64xf32>, vector<64x10xf32>, vector<1x10xf32> -> vector<1x10xf32>
    %c0_77 = arith.constant 0 : index
    %c0_78 = arith.constant 0 : index
    %178 = vector.load %arg18[%c0_77, %c0_78] : memref<1x10xf32, #tpu.memory_space<vmem>>, vector<1x10xf32>
    %179 = arith.addf %177, %178 : vector<1x10xf32>
    %180 = vector.shape_cast %179 : vector<1x10xf32> to vector<1x1x10xf32>
    %c0_79 = arith.constant 0 : index
    %c0_80 = arith.constant 0 : index
    %c0_81 = arith.constant 0 : index
    %181 = vector.load %arg19[%c0_79, %c0_80, %c0_81] : memref<1x1x10xf32, #tpu.memory_space<vmem>>, vector<1x1x10xf32>
    tpu.vector_store %arg19[%c0_79, %c0_80, %c0_81], %180 {strides = array<i32>} : memref<1x1x10xf32, #tpu.memory_space<vmem>>, vector<1x1x10xf32>,
    return
  }
  func.func @transform_0(%arg0: i32) -> (i32, i32) {
    %c0_i32 = arith.constant 0 : i32
    %c0_i32_0 = arith.constant 0 : i32
    return %arg0, %c0_i32 : i32, i32
  }
  func.func @transform_1(%arg0: i32) -> (i32, i32) {
    %c0_i32 = arith.constant 0 : i32
    %c0_i32_0 = arith.constant 0 : i32
    %c0_i32_1 = arith.constant 0 : i32
    return %c0_i32, %c0_i32_0 : i32, i32
  }
  func.func @transform_2(%arg0: i32) -> (i32, i32) {
    %c0_i32 = arith.constant 0 : i32
    %c0_i32_0 = arith.constant 0 : i32
    %c0_i32_1 = arith.constant 0 : i32
    return %c0_i32, %c0_i32_0 : i32, i32
  }
  func.func @transform_3(%arg0: i32) -> (i32, i32) {
    %c0_i32 = arith.constant 0 : i32
    %c0_i32_0 = arith.constant 0 : i32
    %c0_i32_1 = arith.constant 0 : i32
    return %c0_i32, %c0_i32_0 : i32, i32
  }
  func.func @transform_4(%arg0: i32) -> (i32, i32) {
    %c0_i32 = arith.constant 0 : i32
    %c0_i32_0 = arith.constant 0 : i32
    %c0_i32_1 = arith.constant 0 : i32
    return %c0_i32, %c0_i32_0 : i32, i32
  }
  func.func @transform_5(%arg0: i32) -> (i32, i32) {
    %c0_i32 = arith.constant 0 : i32
    %c0_i32_0 = arith.constant 0 : i32
    %c0_i32_1 = arith.constant 0 : i32
    return %c0_i32, %c0_i32_0 : i32, i32
  }
  func.func @transform_6(%arg0: i32) -> (i32, i32) {
    %c0_i32 = arith.constant 0 : i32
    %c0_i32_0 = arith.constant 0 : i32
    %c0_i32_1 = arith.constant 0 : i32
    return %c0_i32, %c0_i32_0 : i32, i32
  }
  func.func @transform_7(%arg0: i32) -> (i32, i32) {
    %c0_i32 = arith.constant 0 : i32
    %c0_i32_0 = arith.constant 0 : i32
    %c0_i32_1 = arith.constant 0 : i32
    return %c0_i32, %c0_i32_0 : i32, i32
  }
  func.func @transform_8(%arg0: i32) -> (i32, i32) {
    %c0_i32 = arith.constant 0 : i32
    %c0_i32_0 = arith.constant 0 : i32
    %c0_i32_1 = arith.constant 0 : i32
    return %c0_i32, %c0_i32_0 : i32, i32
  }
  func.func @transform_9(%arg0: i32) -> (i32, i32) {
    %c0_i32 = arith.constant 0 : i32
    %c0_i32_0 = arith.constant 0 : i32
    %c0_i32_1 = arith.constant 0 : i32
    return %c0_i32, %c0_i32_0 : i32, i32
  }
  func.func @transform_10(%arg0: i32) -> (i32, i32) {
    %c0_i32 = arith.constant 0 : i32
    %c0_i32_0 = arith.constant 0 : i32
    %c0_i32_1 = arith.constant 0 : i32
    return %c0_i32, %c0_i32_0 : i32, i32
  }
  func.func @transform_11(%arg0: i32) -> (i32, i32) {
    %c0_i32 = arith.constant 0 : i32
    %c0_i32_0 = arith.constant 0 : i32
    %c0_i32_1 = arith.constant 0 : i32
    return %c0_i32, %c0_i32_0 : i32, i32
  }
  func.func @transform_12(%arg0: i32) -> (i32, i32) {
    %c0_i32 = arith.constant 0 : i32
    %c0_i32_0 = arith.constant 0 : i32
    %c0_i32_1 = arith.constant 0 : i32
    return %c0_i32, %c0_i32_0 : i32, i32
  }
  func.func @transform_13(%arg0: i32) -> (i32, i32) {
    %c0_i32 = arith.constant 0 : i32
    %c0_i32_0 = arith.constant 0 : i32
    %c0_i32_1 = arith.constant 0 : i32
    return %c0_i32, %c0_i32_0 : i32, i32
  }
  func.func @transform_14(%arg0: i32) -> (i32, i32) {
    %c0_i32 = arith.constant 0 : i32
    %c0_i32_0 = arith.constant 0 : i32
    %c0_i32_1 = arith.constant 0 : i32
    return %c0_i32, %c0_i32_0 : i32, i32
  }
  func.func @transform_15(%arg0: i32) -> (i32, i32) {
    %c0_i32 = arith.constant 0 : i32
    %c0_i32_0 = arith.constant 0 : i32
    %c0_i32_1 = arith.constant 0 : i32
    return %c0_i32, %c0_i32_0 : i32, i32
  }
  func.func @transform_16(%arg0: i32) -> (i32, i32) {
    %c0_i32 = arith.constant 0 : i32
    %c0_i32_0 = arith.constant 0 : i32
    %c0_i32_1 = arith.constant 0 : i32
    return %c0_i32, %c0_i32_0 : i32, i32
  }
  func.func @transform_17(%arg0: i32) -> (i32, i32) {
    %c0_i32 = arith.constant 0 : i32
    %c0_i32_0 = arith.constant 0 : i32
    %c0_i32_1 = arith.constant 0 : i32
    return %c0_i32, %c0_i32_0 : i32, i32
  }
  func.func @transform_18(%arg0: i32) -> (i32, i32, i32) {
    %c0_i32 = arith.constant 0 : i32
    %c0_i32_0 = arith.constant 0 : i32
    %c0_i32_1 = arith.constant 0 : i32
    return %arg0, %c0_i32, %c0_i32_0 : i32, i32, i32
  }
}

</mosaic_0001>

<llo_original>
// kernel: simple_composition_forward.2
$region0: #{simple_composition_forward.2}
  #allocation0 [shape = 'u32[]', space=smem, size = 0x4, offset = 0x4, fixed_abs, tag = 'smem constant byte address 0x4 - core index']
  #allocation1 [shape = 'u32[72,128]{1,0:T(1,128)}', space=vmem, size = 0x9000, scoped, tag = 'internal scratch']
  %s0 = inlined_call_operand.vmem [shape: f32[32,2048], index: 0, kind: input, shape index: {}]
  %s1 = inlined_call_operand.vmem [shape: f32[8,32], index: 1, kind: input, shape index: {}]
  %s2 = inlined_call_operand.vmem [shape: f32[8,1], index: 2, kind: input, shape index: {}]
  %s3 = inlined_call_operand.vmem [shape: f32[8,512], index: 3, kind: output, shape index: {}]
  %s4 = sld [smem:[#allocation0]]
  $region68: #{simple_composition_forward.2} parent=0
    _
  %s6 = ssub.s32 1, %s4
  %s7 = scalar_select 0, %s6, %s4
  $region1: #{simple_composition_forward.2} parent=0
    #allocation2 [shape = 'u8[262144]{0}', space=vmem, size = 0x40000, scoped, tag = 'input window, operand 0']
    loop: start=0, step=1, limit=4
    $region2: #{simple_composition_forward.2} parent=1 // loop_pre_header
      _
    $region3: #{simple_composition_forward.2} parent=1 // loop_header
      %s9 = sphi 0, %s13
      %p10 = scmp.ge.s32.totalorder %s9, 4
      %s19 = sphi 0, %s21
      %s22 = sphi 0, %s19
      %s23 = sphi 0, %s22
      %s39 = sphi 0, %s23
      %s43 = sphi 0, %s43
      %s45 = sphi 0, %s43
      %s46 = sphi 0, %s45
      %s60 = sphi 0, %s46
      %s64 = sphi 0, %s64
      %s66 = sphi 0, %s64
      %s67 = sphi 0, %s66
      %s81 = sphi 0, %s67
      %s87 = sphi 0, %s89
      %s90 = sphi 0, %s87
      %s91 = sphi 0, %s90
      %s107 = sphi 0, %s91
    $region4: #{simple_composition_forward.2} parent=1 // loop_header_branch
      %12 = sbr.rel (%p10) target = $region8
    $region5: #{simple_composition_forward.2} parent=1 // loop_body
      %s14 = ssub.s32 %s9, 1
      %s15 = ssub.s32 %s9, 2
      %s16 = sadd.s32 %s9, 1
      %s17 = ssub.s32 %s9, %s16
      %p18 = scmp.eq.s32.totalorder %s17, 0
      %s20 = sadd.s32 %s19, 1
      %s21 = scalar_select %p18, %s19, %s20
      %p24 = pneg %p18
      %p25 = scmp.eq.s32.totalorder %s9, 1
      %p26 = por %p24, %p25
      %p27 = scmp.ne.s32.totalorder %s19, %s22
      %p28 = scmp.eq.s32.totalorder %s9, 0
      %p29 = por %p27, %p28
      %p30 = scmp.ne.s32.totalorder %s19, %s22
      %p31 = scmp.eq.s32.totalorder %s14, 1
      %p32 = por %p30, %p31
      %p33 = scmp.ne.s32.totalorder %s22, %s23
      %p34 = scmp.eq.s32.totalorder %s14, 0
      %p35 = por %p33, %p34
      %p36 = scmp.ne.s32.totalorder %s22, %s23
      %p37 = scmp.eq.s32.totalorder %s15, 1
      %p38 = por %p36, %p37
      %p40 = scmp.ne.s32.totalorder %s23, %s39
      %p41 = scmp.eq.s32.totalorder %s15, 0
      %p42 = por %p40, %p41
      %s44 = sadd.s32 %s43, 1
      %p47 = scmp.eq.s32.totalorder %s9, 1
      %p48 = scmp.ne.s32.totalorder %s43, %s45
      %p49 = scmp.eq.s32.totalorder %s9, 0
      %p50 = por %p48, %p49
      %p51 = scmp.ne.s32.totalorder %s43, %s45
      %p52 = scmp.eq.s32.totalorder %s14, 1
      %p53 = por %p51, %p52
      %p54 = scmp.ne.s32.totalorder %s45, %s46
      %p55 = scmp.eq.s32.totalorder %s14, 0
      %p56 = por %p54, %p55
      %p57 = scmp.ne.s32.totalorder %s45, %s46
      %p58 = scmp.eq.s32.totalorder %s15, 1
      %p59 = por %p57, %p58
      %p61 = scmp.ne.s32.totalorder %s46, %s60
      %p62 = scmp.eq.s32.totalorder %s15, 0
      %p63 = por %p61, %p62
      %s65 = sadd.s32 %s64, 1
      %p68 = scmp.eq.s32.totalorder %s9, 1
      %p69 = scmp.ne.s32.totalorder %s64, %s66
      %p70 = scmp.eq.s32.totalorder %s9, 0
      %p71 = por %p69, %p70
      %p72 = scmp.ne.s32.totalorder %s64, %s66
      %p73 = scmp.eq.s32.totalorder %s14, 1
      %p74 = por %p72, %p73
      %p75 = scmp.ne.s32.totalorder %s66, %s67
      %p76 = scmp.eq.s32.totalorder %s14, 0
      %p77 = por %p75, %p76
      %p78 = scmp.ne.s32.totalorder %s66, %s67
      %p79 = scmp.eq.s32.totalorder %s15, 1
      %p80 = por %p78, %p79
      %p82 = scmp.ne.s32.totalorder %s67, %s81
      %p83 = scmp.eq.s32.totalorder %s15, 0
      %p84 = por %p82, %p83
      %s85 = ssub.s32 %s9, %s16
      %p86 = scmp.eq.s32.totalorder %s85, 0
      %s88 = sadd.s32 %s87, 1
      %s89 = scalar_select %p86, %s87, %s88
      %p92 = pneg %p86
      %p93 = scmp.eq.s32.totalorder %s9, 1
      %p94 = por %p92, %p93
      %p95 = scmp.ne.s32.totalorder %s87, %s90
      %p96 = scmp.eq.s32.totalorder %s9, 0
      %p97 = por %p95, %p96
      %p98 = scmp.ne.s32.totalorder %s87, %s90
      %p99 = scmp.eq.s32.totalorder %s14, 1
      %p100 = por %p98, %p99
      %p101 = scmp.ne.s32.totalorder %s90, %s91
      %p102 = scmp.eq.s32.totalorder %s14, 0
      %p103 = por %p101, %p102
      %p104 = scmp.ne.s32.totalorder %s90, %s91
      %p105 = scmp.eq.s32.totalorder %s15, 1
      %p106 = por %p104, %p105
      %p108 = scmp.ne.s32.totalorder %s91, %s107
      %p109 = scmp.eq.s32.totalorder %s15, 0
      %p110 = por %p108, %p109
      %p111 = scmp.le.s32.totalorder 1, %s9
      %p112 = scmp.lt.s32.totalorder %s9, 3
      %p113 = pnand %p111, %p112
      %p114 = pneg %p113
      // Predicated region
      $region9: #{simple_composition_forward.2} parent=5 // pred_check
        _
      $region10: #{simple_composition_forward.2} parent=5 // pred_check_branch
        %116 = sbr.rel (%p113) target = $region12
      $region11: #{simple_composition_forward.2} parent=5 // pred_region
        %s117 = ssub.s32 %s9, 1
        // Predicated region
        $region13: #{simple_composition_forward.2} parent=11 // pred_check
          %p118 = pneg %p56
        $region14: #{simple_composition_forward.2} parent=11 // pred_check_branch
          %120 = sbr.rel (%p118) target = $region16
        $region15: #{simple_composition_forward.2} parent=11 // pred_region
          _
        $region16: #{simple_composition_forward.2} parent=11 // pred_fallthru
          _
        // Predicated region
        $region17: #{simple_composition_forward.2} parent=11 // pred_check
          %p121 = pneg %p77
        $region18: #{simple_composition_forward.2} parent=11 // pred_check_branch
          %123 = sbr.rel (%p121) target = $region20
        $region19: #{simple_composition_forward.2} parent=11 // pred_region
          _
        $region20: #{simple_composition_forward.2} parent=11 // pred_fallthru
          _
      $region12: #{simple_composition_forward.2} parent=5 // pred_fallthru
        _
      %p124 = scmp.lt.s32.totalorder %s9, 2
      // Predicated region
      $region21: #{simple_composition_forward.2} parent=5 // pred_check
        %p125 = pneg %p124
      $region22: #{simple_composition_forward.2} parent=5 // pred_check_branch
        %127 = sbr.rel (%p125) target = $region24
      $region23: #{simple_composition_forward.2} parent=5 // pred_region
        // Predicated region
        $region25: #{simple_composition_forward.2} parent=23 // pred_check
          %p128 = pneg %p29
        $region26: #{simple_composition_forward.2} parent=23 // pred_check_branch
          %130 = sbr.rel (%p128) target = $region28
        $region27: #{simple_composition_forward.2} parent=23 // pred_region
          %s131 = sand.u32 %s19, 1
          %s132 = sand.u32 %s19, 1
          %s133 = smul.addr %s132, 256
          %s134 = scalar_lea.vmem [#allocation2], %s133
          %s135 = smul.u32 8, %s9
          %s136 = smul.addr %s135, 8
          %s137 = scalar_lea.vmem %s0, %s136
          // Predicated region
          $region29: #{simple_composition_forward.2} parent=27 // pred_check
            _
          $region30: #{simple_composition_forward.2} parent=27 // pred_check_branch
            %139 = sbr.rel (0) target = $region32
          $region31: #{simple_composition_forward.2} parent=27 // pred_region
            // Predicated region
            $region33: #{simple_composition_forward.2} parent=31 // pred_check
              _
            $region34: #{simple_composition_forward.2} parent=31 // pred_check_branch
              %141 = sbr.rel (0) target = $region36
            $region35: #{simple_composition_forward.2} parent=31 // pred_region
              loop: start=0, step=1, limit=1
              $region37: #{simple_composition_forward.2} parent=35 // loop_pre_header
                _
              $region38: #{simple_composition_forward.2} parent=35 // loop_header
                %s143 = sphi 0, %s147
                %p144 = scmp.ge.s32.totalorder %s143, 1
                %s148 = sphi %s137, %s137
                %s149 = sphi %s134, %s134
              $region39: #{simple_composition_forward.2} parent=35 // loop_header_branch
                %146 = sbr.rel (%p144) target = $region43
              $region40: #{simple_composition_forward.2} parent=35 // loop_body
                %v150 = vld [vmem:[%s148] sm:$0xff]
                %151 = vst [vmem:[%s149] sm:$0xff] %v150
                %v152 = vld [vmem:[%s148 + $0x8] sm:$0xff]
                %153 = vst [vmem:[%s149 + $0x8] sm:$0xff] %v152
                %v154 = vld [vmem:[%s148 + $0x10] sm:$0xff]
                %155 = vst [vmem:[%s149 + $0x10] sm:$0xff] %v154
                %v156 = vld [vmem:[%s148 + $0x18] sm:$0xff]
                %157 = vst [vmem:[%s149 + $0x18] sm:$0xff] %v156
                %v158 = vld [vmem:[%s148 + $0x20] sm:$0xff]
                %159 = vst [vmem:[%s149 + $0x20] sm:$0xff] %v158
                %v160 = vld [vmem:[%s148 + $0x28] sm:$0xff]
                %161 = vst [vmem:[%s149 + $0x28] sm:$0xff] %v160
                %v162 = vld [vmem:[%s148 + $0x30] sm:$0xff]
                %163 = vst [vmem:[%s149 + $0x30] sm:$0xff] %v162
                %v164 = vld [vmem:[%s148 + $0x38] sm:$0xff]
                %165 = vst [vmem:[%s149 + $0x38] sm:$0xff] %v164
                %v166 = vld [vmem:[%s148 + $0x80] sm:$0xff]
                %167 = vst [vmem:[%s149 + $0x40] sm:$0xff] %v166
                %v168 = vld [vmem:[%s148 + $0x88] sm:$0xff]
                %169 = vst [vmem:[%s149 + $0x48] sm:$0xff] %v168
                %v170 = vld [vmem:[%s148 + $0x90] sm:$0xff]
                %171 = vst [vmem:[%s149 + $0x50] sm:$0xff] %v170
                %v172 = vld [vmem:[%s148 + $0x98] sm:$0xff]
                %173 = vst [vmem:[%s149 + $0x58] sm:$0xff] %v172
                %v174 = vld [vmem:[%s148 + $0xa0] sm:$0xff]
                %175 = vst [vmem:[%s149 + $0x60] sm:$0xff] %v174
                %v176 = vld [vmem:[%s148 + $0xa8] sm:$0xff]
                %177 = vst [vmem:[%s149 + $0x68] sm:$0xff] %v176
                %v178 = vld [vmem:[%s148 + $0xb0] sm:$0xff]
                %179 = vst [vmem:[%s149 + $0x70] sm:$0xff] %v178
                %v180 = vld [vmem:[%s148 + $0xb8] sm:$0xff]
                %181 = vst [vmem:[%s149 + $0x78] sm:$0xff] %v180
                %v182 = vld [vmem:[%s148 + $0x100] sm:$0xff]
                %183 = vst [vmem:[%s149 + $0x80] sm:$0xff] %v182
                %v184 = vld [vmem:[%s148 + $0x108] sm:$0xff]
                %185 = vst [vmem:[%s149 + $0x88] sm:$0xff] %v184
                %v186 = vld [vmem:[%s148 + $0x110] sm:$0xff]
                %187 = vst [vmem:[%s149 + $0x90] sm:$0xff] %v186
                %v188 = vld [vmem:[%s148 + $0x118] sm:$0xff]
                %189 = vst [vmem:[%s149 + $0x98] sm:$0xff] %v188
                %v190 = vld [vmem:[%s148 + $0x120] sm:$0xff]
                %191 = vst [vmem:[%s149 + $0xa0] sm:$0xff] %v190
                %v192 = vld [vmem:[%s148 + $0x128] sm:$0xff]
                %193 = vst [vmem:[%s149 + $0xa8] sm:$0xff] %v192
                %v194 = vld [vmem:[%s148 + $0x130] sm:$0xff]
                %195 = vst [vmem:[%s149 + $0xb0] sm:$0xff] %v194
                %v196 = vld [vmem:[%s148 + $0x138] sm:$0xff]
                %197 = vst [vmem:[%s149 + $0xb8] sm:$0xff] %v196
                %v198 = vld [vmem:[%s148 + $0x180] sm:$0xff]
                %199 = vst [vmem:[%s149 + $0xc0] sm:$0xff] %v198
                %v200 = vld [vmem:[%s148 + $0x188] sm:$0xff]
                %201 = vst [vmem:[%s149 + $0xc8] sm:$0xff] %v200
                %v202 = vld [vmem:[%s148 + $0x190] sm:$0xff]
                %203 = vst [vmem:[%s149 + $0xd0] sm:$0xff] %v202
                %v204 = vld [vmem:[%s148 + $0x198] sm:$0xff]
                %205 = vst [vmem:[%s149 + $0xd8] sm:$0xff] %v204
                %v206 = vld [vmem:[%s148 + $0x1a0] sm:$0xff]
                %207 = vst [vmem:[%s149 + $0xe0] sm:$0xff] %v206
                %v208 = vld [vmem:[%s148 + $0x1a8] sm:$0xff]
                %209 = vst [vmem:[%s149 + $0xe8] sm:$0xff] %v208
                %v210 = vld [vmem:[%s148 + $0x1b0] sm:$0xff]
                %211 = vst [vmem:[%s149 + $0xf0] sm:$0xff] %v210
                %v212 = vld [vmem:[%s148 + $0x1b8] sm:$0xff]
                %213 = vst [vmem:[%s149 + $0xf8] sm:$0xff] %v212
              $region41: #{simple_composition_forward.2} parent=35 // loop_footer
                %s147 = sadd.s32 1, %s143
              $region42: #{simple_composition_forward.2} parent=35 // loop_footer_branch
                %142 = sbr.rel target = $region38
              $region43: #{simple_composition_forward.2} parent=35 // loop_exit
                _
            $region36: #{simple_composition_forward.2} parent=31 // pred_fallthru
              _
            // Predicated region
            $region44: #{simple_composition_forward.2} parent=31 // pred_check
              _
            $region45: #{simple_composition_forward.2} parent=31 // pred_check_branch
              %215 = sbr.rel target = $region47
            $region46: #{simple_composition_forward.2} parent=31 // pred_region
              _
            $region47: #{simple_composition_forward.2} parent=31 // pred_fallthru
              _
          $region32: #{simple_composition_forward.2} parent=27 // pred_fallthru
            _
          %216 = vnop
        $region28: #{simple_composition_forward.2} parent=23 // pred_fallthru
          _
      $region24: #{simple_composition_forward.2} parent=5 // pred_fallthru
        _
      %p217 = scmp.le.s32.totalorder 1, %s9
      %p218 = scmp.lt.s32.totalorder %s9, 3
      %p219 = pnand %p217, %p218
      %p220 = pneg %p219
      // Predicated region
      $region48: #{simple_composition_forward.2} parent=5 // pred_check
        _
      $region49: #{simple_composition_forward.2} parent=5 // pred_check_branch
        %222 = sbr.rel (%p219) target = $region51
      $region50: #{simple_composition_forward.2} parent=5 // pred_region
        %s223 = ssub.s32 %s9, 1
        %s224 = sand.u32 %s22, 1
        %s225 = sand.u32 %s22, 1
        %s226 = smul.addr %s225, 256
        %s227 = scalar_lea.vmem [#allocation2], %s226
        // Predicated region
        $region52: #{simple_composition_forward.2} parent=50 // pred_check
          %p228 = pneg %p35
        $region53: #{simple_composition_forward.2} parent=50 // pred_check_branch
          %230 = sbr.rel (%p228) target = $region55
        $region54: #{simple_composition_forward.2} parent=50 // pred_region
          _
        $region55: #{simple_composition_forward.2} parent=50 // pred_fallthru
          _
        %s231 = sand.u32 %s22, 1
        %s232 = sand.u32 %s22, 1
        %s233 = smul.addr %s232, 256
        %s234 = scalar_lea.vmem [#allocation2], %s233
        %p235 = pneg %p35
        %p236 = pneg %p32
        %p237 = pneg %p56
        %p238 = pneg %p53
        %p239 = pneg %p77
        %p240 = pneg %p74
        %p241 = pneg %p103
        %p242 = pneg %p100
        %s243 = smul.u32 2, %s14
        %p244 = scmp.lt.s32.totalorder %s243, 3
        %s245 = scalar_select %p244, %s243, 3
        %s246 = smul.addr %s245, 8
        %s247 = scalar_lea.vmem %s3, %s246
        %s248 = smul.u32 8, %s14
        %s249 = smul.u32 2, %s14
        %p250 = scmp.lt.s32.totalorder %s249, 3
        %s251 = scalar_select %p250, %s249, 3
        %s252 = smul.addr %s251, 8
        %s253 = scalar_lea.vmem %s3, %s252
        %s254 = smul.u32 2, %s14
        %v255 = vld [vmem:[%s1] sm:$0xff]
        %v256 = vld [vmem:[%s227] sm:$0xff]
        %v257 = vld [vmem:[%s227 + $0x8] sm:$0xff]
        %v258 = vld [vmem:[%s227 + $0x10] sm:$0xff]
        %v259 = vld [vmem:[%s227 + $0x18] sm:$0xff]
        %v260 = vld [vmem:[%s227 + $0x20] sm:$0xff]
        %v261 = vld [vmem:[%s227 + $0x28] sm:$0xff]
        %v262 = vld [vmem:[%s227 + $0x30] sm:$0xff]
        %v263 = vld [vmem:[%s227 + $0x38] sm:$0xff]
        %v264 = vld [vmem:[%s227 + $0x40] sm:$0xff]
        %v265 = vld [vmem:[%s227 + $0x48] sm:$0xff]
        %v266 = vld [vmem:[%s227 + $0x50] sm:$0xff]
        %v267 = vld [vmem:[%s227 + $0x58] sm:$0xff]
        %v268 = vld [vmem:[%s227 + $0x60] sm:$0xff]
        %v269 = vld [vmem:[%s227 + $0x68] sm:$0xff]
        %v270 = vld [vmem:[%s227 + $0x70] sm:$0xff]
        %v271 = vld [vmem:[%s227 + $0x78] sm:$0xff]
        %v272 = vld [vmem:[%s227 + $0x80] sm:$0xff]
        %v273 = vld [vmem:[%s227 + $0x88] sm:$0xff]
        %v274 = vld [vmem:[%s227 + $0x90] sm:$0xff]
        %v275 = vld [vmem:[%s227 + $0x98] sm:$0xff]
        %v276 = vld [vmem:[%s227 + $0xa0] sm:$0xff]
        %v277 = vld [vmem:[%s227 + $0xa8] sm:$0xff]
        %v278 = vld [vmem:[%s227 + $0xb0] sm:$0xff]
        %v279 = vld [vmem:[%s227 + $0xb8] sm:$0xff]
        %v280 = vld [vmem:[%s227 + $0xc0] sm:$0xff]
        %v281 = vld [vmem:[%s227 + $0xc8] sm:$0xff]
        %v282 = vld [vmem:[%s227 + $0xd0] sm:$0xff]
        %v283 = vld [vmem:[%s227 + $0xd8] sm:$0xff]
        %v284 = vld [vmem:[%s227 + $0xe0] sm:$0xff]
        %v285 = vld [vmem:[%s227 + $0xe8] sm:$0xff]
        %v286 = vld [vmem:[%s227 + $0xf0] sm:$0xff]
        %v287 = vld [vmem:[%s227 + $0xf8] sm:$0xff]
        %v288 = vld [vmem:[%s2] sm:$0xff]
        %290 = vset.pattern.permute.xlu0 0
        %291 = vperm.xlu0 %290, %v288
        %v292 = vpop.permute.xlu0 %291
        %vm294 = vcmask 261120
        %v296 = vsel %vm294, %v255, 0
        %298 = vmatpush.msra.mxu0 0.0
        %299 = vmatpush.msra.mxu0 0.0
        %300 = vmatpush.msra.mxu0 0.0
        %301 = vmatpush.msra.mxu0 0.0
        %302 = vmatpush.msra.mxu0 0.0
        %303 = vmatpush.msra.mxu0 0.0
        %304 = vmatpush.msra.mxu0 0.0
        %305 = vmatpush.msra.mxu0 0.0
        %306 = vmatpush.msra.mxu0 0.0
        %307 = vmatpush.msra.mxu0 0.0
        %308 = vmatpush.msra.mxu0 0.0
        %309 = vmatpush.msra.mxu0 0.0
        %310 = vmatpush.msra.mxu0 %v280
        %311 = vmatpush.msra.mxu0 %v272
        %312 = vmatpush.msra.mxu0 %v264
        %313 = vmatpush.msra.mxu0 %v256
        %314 = vmatmul.f32.gmra.mxu0 %v296
        %v315 = vpop.f32.mrf.mxu0
        %v316 = vadd.f32 %v292, %v315
        %317 = vdwg.mxu0
        %318 = vmatpush.msra.mxu0 0.0
        %319 = vmatpush.msra.mxu0 0.0
        %320 = vmatpush.msra.mxu0 0.0
        %321 = vmatpush.msra.mxu0 0.0
        %322 = vmatpush.msra.mxu0 0.0
        %323 = vmatpush.msra.mxu0 0.0
        %324 = vmatpush.msra.mxu0 0.0
        %325 = vmatpush.msra.mxu0 0.0
        %326 = vmatpush.msra.mxu0 0.0
        %327 = vmatpush.msra.mxu0 0.0
        %328 = vmatpush.msra.mxu0 0.0
        %329 = vmatpush.msra.mxu0 0.0
        %330 = vmatpush.msra.mxu0 %v281
        %331 = vmatpush.msra.mxu0 %v273
        %332 = vmatpush.msra.mxu0 %v265
        %333 = vmatpush.msra.mxu0 %v257
        %334 = vmatmul.f32.gmra.mxu0 %v296
        %v335 = vpop.f32.mrf.mxu0
        %v336 = vadd.f32 %v292, %v335
        %337 = vdwg.mxu0
        %338 = vmatpush.msra.mxu0 0.0
        %339 = vmatpush.msra.mxu0 0.0
        %340 = vmatpush.msra.mxu0 0.0
        %341 = vmatpush.msra.mxu0 0.0
        %342 = vmatpush.msra.mxu0 0.0
        %343 = vmatpush.msra.mxu0 0.0
        %344 = vmatpush.msra.mxu0 0.0
        %345 = vmatpush.msra.mxu0 0.0
        %346 = vmatpush.msra.mxu0 0.0
        %347 = vmatpush.msra.mxu0 0.0
        %348 = vmatpush.msra.mxu0 0.0
        %349 = vmatpush.msra.mxu0 0.0
        %350 = vmatpush.msra.mxu0 %v282
        %351 = vmatpush.msra.mxu0 %v274
        %352 = vmatpush.msra.mxu0 %v266
        %353 = vmatpush.msra.mxu0 %v258
        %354 = vmatmul.f32.gmra.mxu0 %v296
        %v355 = vpop.f32.mrf.mxu0
        %v356 = vadd.f32 %v292, %v355
        %357 = vdwg.mxu0
        %358 = vmatpush.msra.mxu0 0.0
        %359 = vmatpush.msra.mxu0 0.0
        %360 = vmatpush.msra.mxu0 0.0
        %361 = vmatpush.msra.mxu0 0.0
        %362 = vmatpush.msra.mxu0 0.0
        %363 = vmatpush.msra.mxu0 0.0
        %364 = vmatpush.msra.mxu0 0.0
        %365 = vmatpush.msra.mxu0 0.0
        %366 = vmatpush.msra.mxu0 0.0
        %367 = vmatpush.msra.mxu0 0.0
        %368 = vmatpush.msra.mxu0 0.0
        %369 = vmatpush.msra.mxu0 0.0
        %370 = vmatpush.msra.mxu0 %v283
        %371 = vmatpush.msra.mxu0 %v275
        %372 = vmatpush.msra.mxu0 %v267
        %373 = vmatpush.msra.mxu0 %v259
        %374 = vmatmul.f32.gmra.mxu0 %v296
        %v375 = vpop.f32.mrf.mxu0
        %v376 = vadd.f32 %v292, %v375
        %377 = vdwg.mxu0
        %378 = vmatpush.msra.mxu0 0.0
        %379 = vmatpush.msra.mxu0 0.0
        %380 = vmatpush.msra.mxu0 0.0
        %381 = vmatpush.msra.mxu0 0.0
        %382 = vmatpush.msra.mxu0 0.0
        %383 = vmatpush.msra.mxu0 0.0
        %384 = vmatpush.msra.mxu0 0.0
        %385 = vmatpush.msra.mxu0 0.0
        %386 = vmatpush.msra.mxu0 0.0
        %387 = vmatpush.msra.mxu0 0.0
        %388 = vmatpush.msra.mxu0 0.0
        %389 = vmatpush.msra.mxu0 0.0
        %390 = vmatpush.msra.mxu0 %v284
        %391 = vmatpush.msra.mxu0 %v276
        %392 = vmatpush.msra.mxu0 %v268
        %393 = vmatpush.msra.mxu0 %v260
        %394 = vmatmul.f32.gmra.mxu0 %v296
        %v395 = vpop.f32.mrf.mxu0
        %v396 = vadd.f32 %v292, %v395
        %397 = vdwg.mxu0
        %398 = vmatpush.msra.mxu0 0.0
        %399 = vmatpush.msra.mxu0 0.0
        %400 = vmatpush.msra.mxu0 0.0
        %401 = vmatpush.msra.mxu0 0.0
        %402 = vmatpush.msra.mxu0 0.0
        %403 = vmatpush.msra.mxu0 0.0
        %404 = vmatpush.msra.mxu0 0.0
        %405 = vmatpush.msra.mxu0 0.0
        %406 = vmatpush.msra.mxu0 0.0
        %407 = vmatpush.msra.mxu0 0.0
        %408 = vmatpush.msra.mxu0 0.0
        %409 = vmatpush.msra.mxu0 0.0
        %410 = vmatpush.msra.mxu0 %v285
        %411 = vmatpush.msra.mxu0 %v277
        %412 = vmatpush.msra.mxu0 %v269
        %413 = vmatpush.msra.mxu0 %v261
        %414 = vmatmul.f32.gmra.mxu0 %v296
        %v415 = vpop.f32.mrf.mxu0
        %v416 = vadd.f32 %v292, %v415
        %417 = vdwg.mxu0
        %418 = vmatpush.msra.mxu0 0.0
        %419 = vmatpush.msra.mxu0 0.0
        %420 = vmatpush.msra.mxu0 0.0
        %421 = vmatpush.msra.mxu0 0.0
        %422 = vmatpush.msra.mxu0 0.0
        %423 = vmatpush.msra.mxu0 0.0
        %424 = vmatpush.msra.mxu0 0.0
        %425 = vmatpush.msra.mxu0 0.0
        %426 = vmatpush.msra.mxu0 0.0
        %427 = vmatpush.msra.mxu0 0.0
        %428 = vmatpush.msra.mxu0 0.0
        %429 = vmatpush.msra.mxu0 0.0
        %430 = vmatpush.msra.mxu0 %v286
        %431 = vmatpush.msra.mxu0 %v278
        %432 = vmatpush.msra.mxu0 %v270
        %433 = vmatpush.msra.mxu0 %v262
        %434 = vmatmul.f32.gmra.mxu0 %v296
        %v435 = vpop.f32.mrf.mxu0
        %v436 = vadd.f32 %v292, %v435
        %437 = vdwg.mxu0
        %438 = vmatpush.msra.mxu0 0.0
        %439 = vmatpush.msra.mxu0 0.0
        %440 = vmatpush.msra.mxu0 0.0
        %441 = vmatpush.msra.mxu0 0.0
        %442 = vmatpush.msra.mxu0 0.0
        %443 = vmatpush.msra.mxu0 0.0
        %444 = vmatpush.msra.mxu0 0.0
        %445 = vmatpush.msra.mxu0 0.0
        %446 = vmatpush.msra.mxu0 0.0
        %447 = vmatpush.msra.mxu0 0.0
        %448 = vmatpush.msra.mxu0 0.0
        %449 = vmatpush.msra.mxu0 0.0
        %450 = vmatpush.msra.mxu0 %v287
        %451 = vmatpush.msra.mxu0 %v279
        %452 = vmatpush.msra.mxu0 %v271
        %453 = vmatpush.msra.mxu0 %v263
        %454 = vmatmul.f32.gmra.mxu0 %v296
        %v455 = vpop.f32.mrf.mxu0
        %v456 = vadd.f32 %v292, %v455
        %457 = vdwg.mxu0
        %v458 = vmax.f32 %v316, 0.0
        %v459 = vmax.f32 %v336, 0.0
        %v460 = vmax.f32 %v356, 0.0
        %v461 = vmax.f32 %v376, 0.0
        %v462 = vmax.f32 %v396, 0.0
        %v463 = vmax.f32 %v416, 0.0
        %v464 = vmax.f32 %v436, 0.0
        %v465 = vmax.f32 %v456, 0.0
        %v466 = vmax.f32 %v458, %v460
        %v467 = vmax.f32 %v459, %v461
        %v468 = vmax.f32 %v462, %v464
        %v469 = vmax.f32 %v463, %v465
        %v470 = vmax.f32 %v466, %v468
        %v471 = vmax.f32 %v467, %v469
        %472 = vst [vmem:[%s253] sm:$0xff] %v470
        %473 = vst [vmem:[%s253 + $0x8] sm:$0xff] %v471
        %s474 = smul.u32 2, %s14
        %p475 = scmp.lt.s32.totalorder %s474, 3
        %s476 = scalar_select %p475, %s474, 3
        %s477 = smul.addr %s476, 8
        %s478 = scalar_lea.vmem %s3, %s477
        // Predicated region
        $region56: #{simple_composition_forward.2} parent=50 // pred_check
          %p479 = pneg %p100
        $region57: #{simple_composition_forward.2} parent=50 // pred_check_branch
          %481 = sbr.rel (%p479) target = $region59
        $region58: #{simple_composition_forward.2} parent=50 // pred_region
          %s482 = smul.u32 2, %s14
        $region59: #{simple_composition_forward.2} parent=50 // pred_fallthru
          _
      $region51: #{simple_composition_forward.2} parent=5 // pred_fallthru
        _
      %p483 = scmp.le.s32.totalorder 2, %s9
      // Predicated region
      $region60: #{simple_composition_forward.2} parent=5 // pred_check
        %p484 = pneg %p483
      $region61: #{simple_composition_forward.2} parent=5 // pred_check_branch
        %486 = sbr.rel (%p484) target = $region63
      $region62: #{simple_composition_forward.2} parent=5 // pred_region
        %s487 = ssub.s32 %s9, 2
        // Predicated region
        $region64: #{simple_composition_forward.2} parent=62 // pred_check
          %p488 = pneg %p106
        $region65: #{simple_composition_forward.2} parent=62 // pred_check_branch
          %490 = sbr.rel (%p488) target = $region67
        $region66: #{simple_composition_forward.2} parent=62 // pred_region
          %s491 = smul.u32 2, %s15
          %p492 = scmp.lt.s32.totalorder %s491, 3
          %s493 = scalar_select %p492, %s491, 3
          %s494 = smul.addr %s493, 8
          %s495 = scalar_lea.vmem %s3, %s494
        $region67: #{simple_composition_forward.2} parent=62 // pred_fallthru
          _
      $region63: #{simple_composition_forward.2} parent=5 // pred_fallthru
        _
    $region6: #{simple_composition_forward.2} parent=1 // loop_footer
      %s13 = sadd.s32 1, %s9
    $region7: #{simple_composition_forward.2} parent=1 // loop_footer_branch
      %8 = sbr.rel target = $region3
    $region8: #{simple_composition_forward.2} parent=1 // loop_exit
      _

// kernel: simple_composition_forward.3
$region0: #{simple_composition_forward.3}
  #allocation0 [shape = 'u32[]', space=smem, size = 0x4, offset = 0x4, fixed_abs, tag = 'smem constant byte address 0x4 - core index']
  #allocation1 [shape = 'u32[72,128]{1,0:T(1,128)}', space=vmem, size = 0x9000, scoped, tag = 'internal scratch']
  %s0 = inlined_call_operand.vmem [shape: f32[32,128], index: 0, kind: input, shape index: {}]
  %s1 = inlined_call_operand.vmem [shape: f32[16,64], index: 1, kind: input, shape index: {}]
  %s2 = inlined_call_operand.vmem [shape: f32[128,64], index: 2, kind: input, shape index: {}]
  %s3 = inlined_call_operand.vmem [shape: f32[1,64], index: 3, kind: input, shape index: {}]
  %s4 = inlined_call_operand.vmem [shape: f32[1,64], index: 4, kind: input, shape index: {}]
  %s5 = inlined_call_operand.vmem [shape: f32[1,64], index: 5, kind: input, shape index: {}]
  %s6 = inlined_call_operand.vmem [shape: f32[64,192], index: 6, kind: input, shape index: {}]
  %s7 = inlined_call_operand.vmem [shape: f32[1,192], index: 7, kind: input, shape index: {}]
  %s8 = inlined_call_operand.vmem [shape: f32[64,64], index: 8, kind: input, shape index: {}]
  %s9 = inlined_call_operand.vmem [shape: f32[1,64], index: 9, kind: input, shape index: {}]
  %s10 = inlined_call_operand.vmem [shape: f32[1,64], index: 10, kind: input, shape index: {}]
  %s11 = inlined_call_operand.vmem [shape: f32[1,64], index: 11, kind: input, shape index: {}]
  %s12 = inlined_call_operand.vmem [shape: f32[64,128], index: 12, kind: input, shape index: {}]
  %s13 = inlined_call_operand.vmem [shape: f32[1,128], index: 13, kind: input, shape index: {}]
  %s14 = inlined_call_operand.vmem [shape: f32[128,64], index: 14, kind: input, shape index: {}]
  %s15 = inlined_call_operand.vmem [shape: f32[1,64], index: 15, kind: input, shape index: {}]
  %s16 = inlined_call_operand.vmem [shape: f32[64,10], index: 16, kind: input, shape index: {}]
  %s17 = inlined_call_operand.vmem [shape: f32[1,10], index: 17, kind: input, shape index: {}]
  %s18 = inlined_call_operand.hbm [shape: f32[2,1,10], index: 18, kind: output, shape index: {}]
  %s19 = sld [smem:[#allocation0]]
  $region105: #{simple_composition_forward.3} parent=0
    _
  %s21 = ssub.s32 1, %s19
  %s22 = scalar_select 0, %s21, %s19
  $region1: #{simple_composition_forward.3} parent=0
    #allocation2 [shape = 'u8[1024]{0}', space=vmem, size = 0x400, scoped, tag = 'output window, operand 0']
    #allocation3 [shape = 's32[2]{0}', space=sflag, size = 0x8, scoped, tag = 'scoped memory for simple_composition_forward.3']
    %23 = vsyncpa [#allocation3], 0
    %s24 = scalar_lea.sflag [#allocation3], 1
    %25 = vsyncpa %s24, 0
    loop: start=0, step=1, limit=4
    $region2: #{simple_composition_forward.3} parent=1 // loop_pre_header
      _
    $region3: #{simple_composition_forward.3} parent=1 // loop_header
      %s27 = sphi 0, %s31
      %p28 = scmp.ge.s32.totalorder %s27, 4
      %s37 = sphi 0, %s39
      %s40 = sphi 0, %s37
      %s41 = sphi 0, %s40
      %s57 = sphi 0, %s41
      %s61 = sphi 0, %s61
      %s63 = sphi 0, %s61
      %s64 = sphi 0, %s63
      %s78 = sphi 0, %s64
      %s82 = sphi 0, %s82
      %s84 = sphi 0, %s82
      %s85 = sphi 0, %s84
      %s99 = sphi 0, %s85
      %s103 = sphi 0, %s103
      %s105 = sphi 0, %s103
      %s106 = sphi 0, %s105
      %s120 = sphi 0, %s106
      %s124 = sphi 0, %s124
      %s126 = sphi 0, %s124
      %s127 = sphi 0, %s126
      %s141 = sphi 0, %s127
      %s145 = sphi 0, %s145
      %s147 = sphi 0, %s145
      %s148 = sphi 0, %s147
      %s162 = sphi 0, %s148
      %s166 = sphi 0, %s166
      %s168 = sphi 0, %s166
      %s169 = sphi 0, %s168
      %s183 = sphi 0, %s169
      %s187 = sphi 0, %s187
      %s189 = sphi 0, %s187
      %s190 = sphi 0, %s189
      %s204 = sphi 0, %s190
      %s208 = sphi 0, %s208
      %s210 = sphi 0, %s208
      %s211 = sphi 0, %s210
      %s225 = sphi 0, %s211
      %s229 = sphi 0, %s229
      %s231 = sphi 0, %s229
      %s232 = sphi 0, %s231
      %s246 = sphi 0, %s232
      %s250 = sphi 0, %s250
      %s252 = sphi 0, %s250
      %s253 = sphi 0, %s252
      %s267 = sphi 0, %s253
      %s271 = sphi 0, %s271
      %s273 = sphi 0, %s271
      %s274 = sphi 0, %s273
      %s288 = sphi 0, %s274
      %s292 = sphi 0, %s292
      %s294 = sphi 0, %s292
      %s295 = sphi 0, %s294
      %s309 = sphi 0, %s295
      %s313 = sphi 0, %s313
      %s315 = sphi 0, %s313
      %s316 = sphi 0, %s315
      %s330 = sphi 0, %s316
      %s334 = sphi 0, %s334
      %s336 = sphi 0, %s334
      %s337 = sphi 0, %s336
      %s351 = sphi 0, %s337
      %s355 = sphi 0, %s355
      %s357 = sphi 0, %s355
      %s358 = sphi 0, %s357
      %s372 = sphi 0, %s358
      %s376 = sphi 0, %s376
      %s378 = sphi 0, %s376
      %s379 = sphi 0, %s378
      %s393 = sphi 0, %s379
      %s397 = sphi 0, %s397
      %s399 = sphi 0, %s397
      %s400 = sphi 0, %s399
      %s414 = sphi 0, %s400
      %s420 = sphi 0, %s422
      %s423 = sphi 0, %s420
      %s424 = sphi 0, %s423
      %s440 = sphi 0, %s424
    $region4: #{simple_composition_forward.3} parent=1 // loop_header_branch
      %30 = sbr.rel (%p28) target = $region8
    $region5: #{simple_composition_forward.3} parent=1 // loop_body
      %s32 = ssub.s32 %s27, 1
      %s33 = ssub.s32 %s27, 2
      %s34 = sadd.s32 %s27, 1
      %s35 = ssub.s32 %s27, %s34
      %p36 = scmp.eq.s32.totalorder %s35, 0
      %s38 = sadd.s32 %s37, 1
      %s39 = scalar_select %p36, %s37, %s38
      %p42 = pneg %p36
      %p43 = scmp.eq.s32.totalorder %s27, 1
      %p44 = por %p42, %p43
      %p45 = scmp.ne.s32.totalorder %s37, %s40
      %p46 = scmp.eq.s32.totalorder %s27, 0
      %p47 = por %p45, %p46
      %p48 = scmp.ne.s32.totalorder %s37, %s40
      %p49 = scmp.eq.s32.totalorder %s32, 1
      %p50 = por %p48, %p49
      %p51 = scmp.ne.s32.totalorder %s40, %s41
      %p52 = scmp.eq.s32.totalorder %s32, 0
      %p53 = por %p51, %p52
      %p54 = scmp.ne.s32.totalorder %s40, %s41
      %p55 = scmp.eq.s32.totalorder %s33, 1
      %p56 = por %p54, %p55
      %p58 = scmp.ne.s32.totalorder %s41, %s57
      %p59 = scmp.eq.s32.totalorder %s33, 0
      %p60 = por %p58, %p59
      %s62 = sadd.s32 %s61, 1
      %p65 = scmp.eq.s32.totalorder %s27, 1
      %p66 = scmp.ne.s32.totalorder %s61, %s63
      %p67 = scmp.eq.s32.totalorder %s27, 0
      %p68 = por %p66, %p67
      %p69 = scmp.ne.s32.totalorder %s61, %s63
      %p70 = scmp.eq.s32.totalorder %s32, 1
      %p71 = por %p69, %p70
      %p72 = scmp.ne.s32.totalorder %s63, %s64
      %p73 = scmp.eq.s32.totalorder %s32, 0
      %p74 = por %p72, %p73
      %p75 = scmp.ne.s32.totalorder %s63, %s64
      %p76 = scmp.eq.s32.totalorder %s33, 1
      %p77 = por %p75, %p76
      %p79 = scmp.ne.s32.totalorder %s64, %s78
      %p80 = scmp.eq.s32.totalorder %s33, 0
      %p81 = por %p79, %p80
      %s83 = sadd.s32 %s82, 1
      %p86 = scmp.eq.s32.totalorder %s27, 1
      %p87 = scmp.ne.s32.totalorder %s82, %s84
      %p88 = scmp.eq.s32.totalorder %s27, 0
      %p89 = por %p87, %p88
      %p90 = scmp.ne.s32.totalorder %s82, %s84
      %p91 = scmp.eq.s32.totalorder %s32, 1
      %p92 = por %p90, %p91
      %p93 = scmp.ne.s32.totalorder %s84, %s85
      %p94 = scmp.eq.s32.totalorder %s32, 0
      %p95 = por %p93, %p94
      %p96 = scmp.ne.s32.totalorder %s84, %s85
      %p97 = scmp.eq.s32.totalorder %s33, 1
      %p98 = por %p96, %p97
      %p100 = scmp.ne.s32.totalorder %s85, %s99
      %p101 = scmp.eq.s32.totalorder %s33, 0
      %p102 = por %p100, %p101
      %s104 = sadd.s32 %s103, 1
      %p107 = scmp.eq.s32.totalorder %s27, 1
      %p108 = scmp.ne.s32.totalorder %s103, %s105
      %p109 = scmp.eq.s32.totalorder %s27, 0
      %p110 = por %p108, %p109
      %p111 = scmp.ne.s32.totalorder %s103, %s105
      %p112 = scmp.eq.s32.totalorder %s32, 1
      %p113 = por %p111, %p112
      %p114 = scmp.ne.s32.totalorder %s105, %s106
      %p115 = scmp.eq.s32.totalorder %s32, 0
      %p116 = por %p114, %p115
      %p117 = scmp.ne.s32.totalorder %s105, %s106
      %p118 = scmp.eq.s32.totalorder %s33, 1
      %p119 = por %p117, %p118
      %p121 = scmp.ne.s32.totalorder %s106, %s120
      %p122 = scmp.eq.s32.totalorder %s33, 0
      %p123 = por %p121, %p122
      %s125 = sadd.s32 %s124, 1
      %p128 = scmp.eq.s32.totalorder %s27, 1
      %p129 = scmp.ne.s32.totalorder %s124, %s126
      %p130 = scmp.eq.s32.totalorder %s27, 0
      %p131 = por %p129, %p130
      %p132 = scmp.ne.s32.totalorder %s124, %s126
      %p133 = scmp.eq.s32.totalorder %s32, 1
      %p134 = por %p132, %p133
      %p135 = scmp.ne.s32.totalorder %s126, %s127
      %p136 = scmp.eq.s32.totalorder %s32, 0
      %p137 = por %p135, %p136
      %p138 = scmp.ne.s32.totalorder %s126, %s127
      %p139 = scmp.eq.s32.totalorder %s33, 1
      %p140 = por %p138, %p139
      %p142 = scmp.ne.s32.totalorder %s127, %s141
      %p143 = scmp.eq.s32.totalorder %s33, 0
      %p144 = por %p142, %p143
      %s146 = sadd.s32 %s145, 1
      %p149 = scmp.eq.s32.totalorder %s27, 1
      %p150 = scmp.ne.s32.totalorder %s145, %s147
      %p151 = scmp.eq.s32.totalorder %s27, 0
      %p152 = por %p150, %p151
      %p153 = scmp.ne.s32.totalorder %s145, %s147
      %p154 = scmp.eq.s32.totalorder %s32, 1
      %p155 = por %p153, %p154
      %p156 = scmp.ne.s32.totalorder %s147, %s148
      %p157 = scmp.eq.s32.totalorder %s32, 0
      %p158 = por %p156, %p157
      %p159 = scmp.ne.s32.totalorder %s147, %s148
      %p160 = scmp.eq.s32.totalorder %s33, 1
      %p161 = por %p159, %p160
      %p163 = scmp.ne.s32.totalorder %s148, %s162
      %p164 = scmp.eq.s32.totalorder %s33, 0
      %p165 = por %p163, %p164
      %s167 = sadd.s32 %s166, 1
      %p170 = scmp.eq.s32.totalorder %s27, 1
      %p171 = scmp.ne.s32.totalorder %s166, %s168
      %p172 = scmp.eq.s32.totalorder %s27, 0
      %p173 = por %p171, %p172
      %p174 = scmp.ne.s32.totalorder %s166, %s168
      %p175 = scmp.eq.s32.totalorder %s32, 1
      %p176 = por %p174, %p175
      %p177 = scmp.ne.s32.totalorder %s168, %s169
      %p178 = scmp.eq.s32.totalorder %s32, 0
      %p179 = por %p177, %p178
      %p180 = scmp.ne.s32.totalorder %s168, %s169
      %p181 = scmp.eq.s32.totalorder %s33, 1
      %p182 = por %p180, %p181
      %p184 = scmp.ne.s32.totalorder %s169, %s183
      %p185 = scmp.eq.s32.totalorder %s33, 0
      %p186 = por %p184, %p185
      %s188 = sadd.s32 %s187, 1
      %p191 = scmp.eq.s32.totalorder %s27, 1
      %p192 = scmp.ne.s32.totalorder %s187, %s189
      %p193 = scmp.eq.s32.totalorder %s27, 0
      %p194 = por %p192, %p193
      %p195 = scmp.ne.s32.totalorder %s187, %s189
      %p196 = scmp.eq.s32.totalorder %s32, 1
      %p197 = por %p195, %p196
      %p198 = scmp.ne.s32.totalorder %s189, %s190
      %p199 = scmp.eq.s32.totalorder %s32, 0
      %p200 = por %p198, %p199
      %p201 = scmp.ne.s32.totalorder %s189, %s190
      %p202 = scmp.eq.s32.totalorder %s33, 1
      %p203 = por %p201, %p202
      %p205 = scmp.ne.s32.totalorder %s190, %s204
      %p206 = scmp.eq.s32.totalorder %s33, 0
      %p207 = por %p205, %p206
      %s209 = sadd.s32 %s208, 1
      %p212 = scmp.eq.s32.totalorder %s27, 1
      %p213 = scmp.ne.s32.totalorder %s208, %s210
      %p214 = scmp.eq.s32.totalorder %s27, 0
      %p215 = por %p213, %p214
      %p216 = scmp.ne.s32.totalorder %s208, %s210
      %p217 = scmp.eq.s32.totalorder %s32, 1
      %p218 = por %p216, %p217
      %p219 = scmp.ne.s32.totalorder %s210, %s211
      %p220 = scmp.eq.s32.totalorder %s32, 0
      %p221 = por %p219, %p220
      %p222 = scmp.ne.s32.totalorder %s210, %s211
      %p223 = scmp.eq.s32.totalorder %s33, 1
      %p224 = por %p222, %p223
      %p226 = scmp.ne.s32.totalorder %s211, %s225
      %p227 = scmp.eq.s32.totalorder %s33, 0
      %p228 = por %p226, %p227
      %s230 = sadd.s32 %s229, 1
      %p233 = scmp.eq.s32.totalorder %s27, 1
      %p234 = scmp.ne.s32.totalorder %s229, %s231
      %p235 = scmp.eq.s32.totalorder %s27, 0
      %p236 = por %p234, %p235
      %p237 = scmp.ne.s32.totalorder %s229, %s231
      %p238 = scmp.eq.s32.totalorder %s32, 1
      %p239 = por %p237, %p238
      %p240 = scmp.ne.s32.totalorder %s231, %s232
      %p241 = scmp.eq.s32.totalorder %s32, 0
      %p242 = por %p240, %p241
      %p243 = scmp.ne.s32.totalorder %s231, %s232
      %p244 = scmp.eq.s32.totalorder %s33, 1
      %p245 = por %p243, %p244
      %p247 = scmp.ne.s32.totalorder %s232, %s246
      %p248 = scmp.eq.s32.totalorder %s33, 0
      %p249 = por %p247, %p248
      %s251 = sadd.s32 %s250, 1
      %p254 = scmp.eq.s32.totalorder %s27, 1
      %p255 = scmp.ne.s32.totalorder %s250, %s252
      %p256 = scmp.eq.s32.totalorder %s27, 0
      %p257 = por %p255, %p256
      %p258 = scmp.ne.s32.totalorder %s250, %s252
      %p259 = scmp.eq.s32.totalorder %s32, 1
      %p260 = por %p258, %p259
      %p261 = scmp.ne.s32.totalorder %s252, %s253
      %p262 = scmp.eq.s32.totalorder %s32, 0
      %p263 = por %p261, %p262
      %p264 = scmp.ne.s32.totalorder %s252, %s253
      %p265 = scmp.eq.s32.totalorder %s33, 1
      %p266 = por %p264, %p265
      %p268 = scmp.ne.s32.totalorder %s253, %s267
      %p269 = scmp.eq.s32.totalorder %s33, 0
      %p270 = por %p268, %p269
      %s272 = sadd.s32 %s271, 1
      %p275 = scmp.eq.s32.totalorder %s27, 1
      %p276 = scmp.ne.s32.totalorder %s271, %s273
      %p277 = scmp.eq.s32.totalorder %s27, 0
      %p278 = por %p276, %p277
      %p279 = scmp.ne.s32.totalorder %s271, %s273
      %p280 = scmp.eq.s32.totalorder %s32, 1
      %p281 = por %p279, %p280
      %p282 = scmp.ne.s32.totalorder %s273, %s274
      %p283 = scmp.eq.s32.totalorder %s32, 0
      %p284 = por %p282, %p283
      %p285 = scmp.ne.s32.totalorder %s273, %s274
      %p286 = scmp.eq.s32.totalorder %s33, 1
      %p287 = por %p285, %p286
      %p289 = scmp.ne.s32.totalorder %s274, %s288
      %p290 = scmp.eq.s32.totalorder %s33, 0
      %p291 = por %p289, %p290
      %s293 = sadd.s32 %s292, 1
      %p296 = scmp.eq.s32.totalorder %s27, 1
      %p297 = scmp.ne.s32.totalorder %s292, %s294
      %p298 = scmp.eq.s32.totalorder %s27, 0
      %p299 = por %p297, %p298
      %p300 = scmp.ne.s32.totalorder %s292, %s294
      %p301 = scmp.eq.s32.totalorder %s32, 1
      %p302 = por %p300, %p301
      %p303 = scmp.ne.s32.totalorder %s294, %s295
      %p304 = scmp.eq.s32.totalorder %s32, 0
      %p305 = por %p303, %p304
      %p306 = scmp.ne.s32.totalorder %s294, %s295
      %p307 = scmp.eq.s32.totalorder %s33, 1
      %p308 = por %p306, %p307
      %p310 = scmp.ne.s32.totalorder %s295, %s309
      %p311 = scmp.eq.s32.totalorder %s33, 0
      %p312 = por %p310, %p311
      %s314 = sadd.s32 %s313, 1
      %p317 = scmp.eq.s32.totalorder %s27, 1
      %p318 = scmp.ne.s32.totalorder %s313, %s315
      %p319 = scmp.eq.s32.totalorder %s27, 0
      %p320 = por %p318, %p319
      %p321 = scmp.ne.s32.totalorder %s313, %s315
      %p322 = scmp.eq.s32.totalorder %s32, 1
      %p323 = por %p321, %p322
      %p324 = scmp.ne.s32.totalorder %s315, %s316
      %p325 = scmp.eq.s32.totalorder %s32, 0
      %p326 = por %p324, %p325
      %p327 = scmp.ne.s32.totalorder %s315, %s316
      %p328 = scmp.eq.s32.totalorder %s33, 1
      %p329 = por %p327, %p328
      %p331 = scmp.ne.s32.totalorder %s316, %s330
      %p332 = scmp.eq.s32.totalorder %s33, 0
      %p333 = por %p331, %p332
      %s335 = sadd.s32 %s334, 1
      %p338 = scmp.eq.s32.totalorder %s27, 1
      %p339 = scmp.ne.s32.totalorder %s334, %s336
      %p340 = scmp.eq.s32.totalorder %s27, 0
      %p341 = por %p339, %p340
      %p342 = scmp.ne.s32.totalorder %s334, %s336
      %p343 = scmp.eq.s32.totalorder %s32, 1
      %p344 = por %p342, %p343
      %p345 = scmp.ne.s32.totalorder %s336, %s337
      %p346 = scmp.eq.s32.totalorder %s32, 0
      %p347 = por %p345, %p346
      %p348 = scmp.ne.s32.totalorder %s336, %s337
      %p349 = scmp.eq.s32.totalorder %s33, 1
      %p350 = por %p348, %p349
      %p352 = scmp.ne.s32.totalorder %s337, %s351
      %p353 = scmp.eq.s32.totalorder %s33, 0
      %p354 = por %p352, %p353
      %s356 = sadd.s32 %s355, 1
      %p359 = scmp.eq.s32.totalorder %s27, 1
      %p360 = scmp.ne.s32.totalorder %s355, %s357
      %p361 = scmp.eq.s32.totalorder %s27, 0
      %p362 = por %p360, %p361
      %p363 = scmp.ne.s32.totalorder %s355, %s357
      %p364 = scmp.eq.s32.totalorder %s32, 1
      %p365 = por %p363, %p364
      %p366 = scmp.ne.s32.totalorder %s357, %s358
      %p367 = scmp.eq.s32.totalorder %s32, 0
      %p368 = por %p366, %p367
      %p369 = scmp.ne.s32.totalorder %s357, %s358
      %p370 = scmp.eq.s32.totalorder %s33, 1
      %p371 = por %p369, %p370
      %p373 = scmp.ne.s32.totalorder %s358, %s372
      %p374 = scmp.eq.s32.totalorder %s33, 0
      %p375 = por %p373, %p374
      %s377 = sadd.s32 %s376, 1
      %p380 = scmp.eq.s32.totalorder %s27, 1
      %p381 = scmp.ne.s32.totalorder %s376, %s378
      %p382 = scmp.eq.s32.totalorder %s27, 0
      %p383 = por %p381, %p382
      %p384 = scmp.ne.s32.totalorder %s376, %s378
      %p385 = scmp.eq.s32.totalorder %s32, 1
      %p386 = por %p384, %p385
      %p387 = scmp.ne.s32.totalorder %s378, %s379
      %p388 = scmp.eq.s32.totalorder %s32, 0
      %p389 = por %p387, %p388
      %p390 = scmp.ne.s32.totalorder %s378, %s379
      %p391 = scmp.eq.s32.totalorder %s33, 1
      %p392 = por %p390, %p391
      %p394 = scmp.ne.s32.totalorder %s379, %s393
      %p395 = scmp.eq.s32.totalorder %s33, 0
      %p396 = por %p394, %p395
      %s398 = sadd.s32 %s397, 1
      %p401 = scmp.eq.s32.totalorder %s27, 1
      %p402 = scmp.ne.s32.totalorder %s397, %s399
      %p403 = scmp.eq.s32.totalorder %s27, 0
      %p404 = por %p402, %p403
      %p405 = scmp.ne.s32.totalorder %s397, %s399
      %p406 = scmp.eq.s32.totalorder %s32, 1
      %p407 = por %p405, %p406
      %p408 = scmp.ne.s32.totalorder %s399, %s400
      %p409 = scmp.eq.s32.totalorder %s32, 0
      %p410 = por %p408, %p409
      %p411 = scmp.ne.s32.totalorder %s399, %s400
      %p412 = scmp.eq.s32.totalorder %s33, 1
      %p413 = por %p411, %p412
      %p415 = scmp.ne.s32.totalorder %s400, %s414
      %p416 = scmp.eq.s32.totalorder %s33, 0
      %p417 = por %p415, %p416
      %s418 = ssub.s32 %s27, %s34
      %p419 = scmp.eq.s32.totalorder %s418, 0
      %s421 = sadd.s32 %s420, 1
      %s422 = scalar_select %p419, %s420, %s421
      %p425 = pneg %p419
      %p426 = scmp.eq.s32.totalorder %s27, 1
      %p427 = por %p425, %p426
      %p428 = scmp.ne.s32.totalorder %s420, %s423
      %p429 = scmp.eq.s32.totalorder %s27, 0
      %p430 = por %p428, %p429
      %p431 = scmp.ne.s32.totalorder %s420, %s423
      %p432 = scmp.eq.s32.totalorder %s32, 1
      %p433 = por %p431, %p432
      %p434 = scmp.ne.s32.totalorder %s423, %s424
      %p435 = scmp.eq.s32.totalorder %s32, 0
      %p436 = por %p434, %p435
      %p437 = scmp.ne.s32.totalorder %s423, %s424
      %p438 = scmp.eq.s32.totalorder %s33, 1
      %p439 = por %p437, %p438
      %p441 = scmp.ne.s32.totalorder %s424, %s440
      %p442 = scmp.eq.s32.totalorder %s33, 0
      %p443 = por %p441, %p442
      %p444 = scmp.le.s32.totalorder 1, %s27
      %p445 = scmp.lt.s32.totalorder %s27, 3
      %p446 = pnand %p444, %p445
      %p447 = pneg %p446
      // Predicated region
      $region9: #{simple_composition_forward.3} parent=5 // pred_check
        _
      $region10: #{simple_composition_forward.3} parent=5 // pred_check_branch
        %449 = sbr.rel (%p446) target = $region12
      $region11: #{simple_composition_forward.3} parent=5 // pred_region
        %s450 = ssub.s32 %s27, 1
        // Predicated region
        $region13: #{simple_composition_forward.3} parent=11 // pred_check
          %p451 = pneg %p74
        $region14: #{simple_composition_forward.3} parent=11 // pred_check_branch
          %453 = sbr.rel (%p451) target = $region16
        $region15: #{simple_composition_forward.3} parent=11 // pred_region
          _
        $region16: #{simple_composition_forward.3} parent=11 // pred_fallthru
          _
        // Predicated region
        $region17: #{simple_composition_forward.3} parent=11 // pred_check
          %p454 = pneg %p95
        $region18: #{simple_composition_forward.3} parent=11 // pred_check_branch
          %456 = sbr.rel (%p454) target = $region20
        $region19: #{simple_composition_forward.3} parent=11 // pred_region
          _
        $region20: #{simple_composition_forward.3} parent=11 // pred_fallthru
          _
        // Predicated region
        $region21: #{simple_composition_forward.3} parent=11 // pred_check
          %p457 = pneg %p116
        $region22: #{simple_composition_forward.3} parent=11 // pred_check_branch
          %459 = sbr.rel (%p457) target = $region24
        $region23: #{simple_composition_forward.3} parent=11 // pred_region
          _
        $region24: #{simple_composition_forward.3} parent=11 // pred_fallthru
          _
        // Predicated region
        $region25: #{simple_composition_forward.3} parent=11 // pred_check
          %p460 = pneg %p137
        $region26: #{simple_composition_forward.3} parent=11 // pred_check_branch
          %462 = sbr.rel (%p460) target = $region28
        $region27: #{simple_composition_forward.3} parent=11 // pred_region
          _
        $region28: #{simple_composition_forward.3} parent=11 // pred_fallthru
          _
        // Predicated region
        $region29: #{simple_composition_forward.3} parent=11 // pred_check
          %p463 = pneg %p158
        $region30: #{simple_composition_forward.3} parent=11 // pred_check_branch
          %465 = sbr.rel (%p463) target = $region32
        $region31: #{simple_composition_forward.3} parent=11 // pred_region
          _
        $region32: #{simple_composition_forward.3} parent=11 // pred_fallthru
          _
        // Predicated region
        $region33: #{simple_composition_forward.3} parent=11 // pred_check
          %p466 = pneg %p179
        $region34: #{simple_composition_forward.3} parent=11 // pred_check_branch
          %468 = sbr.rel (%p466) target = $region36
        $region35: #{simple_composition_forward.3} parent=11 // pred_region
          _
        $region36: #{simple_composition_forward.3} parent=11 // pred_fallthru
          _
        // Predicated region
        $region37: #{simple_composition_forward.3} parent=11 // pred_check
          %p469 = pneg %p200
        $region38: #{simple_composition_forward.3} parent=11 // pred_check_branch
          %471 = sbr.rel (%p469) target = $region40
        $region39: #{simple_composition_forward.3} parent=11 // pred_region
          _
        $region40: #{simple_composition_forward.3} parent=11 // pred_fallthru
          _
        // Predicated region
        $region41: #{simple_composition_forward.3} parent=11 // pred_check
          %p472 = pneg %p221
        $region42: #{simple_composition_forward.3} parent=11 // pred_check_branch
          %474 = sbr.rel (%p472) target = $region44
        $region43: #{simple_composition_forward.3} parent=11 // pred_region
          _
        $region44: #{simple_composition_forward.3} parent=11 // pred_fallthru
          _
        // Predicated region
        $region45: #{simple_composition_forward.3} parent=11 // pred_check
          %p475 = pneg %p242
        $region46: #{simple_composition_forward.3} parent=11 // pred_check_branch
          %477 = sbr.rel (%p475) target = $region48
        $region47: #{simple_composition_forward.3} parent=11 // pred_region
          _
        $region48: #{simple_composition_forward.3} parent=11 // pred_fallthru
          _
        // Predicated region
        $region49: #{simple_composition_forward.3} parent=11 // pred_check
          %p478 = pneg %p263
        $region50: #{simple_composition_forward.3} parent=11 // pred_check_branch
          %480 = sbr.rel (%p478) target = $region52
        $region51: #{simple_composition_forward.3} parent=11 // pred_region
          _
        $region52: #{simple_composition_forward.3} parent=11 // pred_fallthru
          _
        // Predicated region
        $region53: #{simple_composition_forward.3} parent=11 // pred_check
          %p481 = pneg %p284
        $region54: #{simple_composition_forward.3} parent=11 // pred_check_branch
          %483 = sbr.rel (%p481) target = $region56
        $region55: #{simple_composition_forward.3} parent=11 // pred_region
          _
        $region56: #{simple_composition_forward.3} parent=11 // pred_fallthru
          _
        // Predicated region
        $region57: #{simple_composition_forward.3} parent=11 // pred_check
          %p484 = pneg %p305
        $region58: #{simple_composition_forward.3} parent=11 // pred_check_branch
          %486 = sbr.rel (%p484) target = $region60
        $region59: #{simple_composition_forward.3} parent=11 // pred_region
          _
        $region60: #{simple_composition_forward.3} parent=11 // pred_fallthru
          _
        // Predicated region
        $region61: #{simple_composition_forward.3} parent=11 // pred_check
          %p487 = pneg %p326
        $region62: #{simple_composition_forward.3} parent=11 // pred_check_branch
          %489 = sbr.rel (%p487) target = $region64
        $region63: #{simple_composition_forward.3} parent=11 // pred_region
          _
        $region64: #{simple_composition_forward.3} parent=11 // pred_fallthru
          _
        // Predicated region
        $region65: #{simple_composition_forward.3} parent=11 // pred_check
          %p490 = pneg %p347
        $region66: #{simple_composition_forward.3} parent=11 // pred_check_branch
          %492 = sbr.rel (%p490) target = $region68
        $region67: #{simple_composition_forward.3} parent=11 // pred_region
          _
        $region68: #{simple_composition_forward.3} parent=11 // pred_fallthru
          _
        // Predicated region
        $region69: #{simple_composition_forward.3} parent=11 // pred_check
          %p493 = pneg %p368
        $region70: #{simple_composition_forward.3} parent=11 // pred_check_branch
          %495 = sbr.rel (%p493) target = $region72
        $region71: #{simple_composition_forward.3} parent=11 // pred_region
          _
        $region72: #{simple_composition_forward.3} parent=11 // pred_fallthru
          _
        // Predicated region
        $region73: #{simple_composition_forward.3} parent=11 // pred_check
          %p496 = pneg %p389
        $region74: #{simple_composition_forward.3} parent=11 // pred_check_branch
          %498 = sbr.rel (%p496) target = $region76
        $region75: #{simple_composition_forward.3} parent=11 // pred_region
          _
        $region76: #{simple_composition_forward.3} parent=11 // pred_fallthru
          _
        // Predicated region
        $region77: #{simple_composition_forward.3} parent=11 // pred_check
          %p499 = pneg %p410
        $region78: #{simple_composition_forward.3} parent=11 // pred_check_branch
          %501 = sbr.rel (%p499) target = $region80
        $region79: #{simple_composition_forward.3} parent=11 // pred_region
          _
        $region80: #{simple_composition_forward.3} parent=11 // pred_fallthru
          _
      $region12: #{simple_composition_forward.3} parent=5 // pred_fallthru
        _
      %p502 = scmp.lt.s32.totalorder %s27, 2
      // Predicated region
      $region81: #{simple_composition_forward.3} parent=5 // pred_check
        %p503 = pneg %p502
      $region82: #{simple_composition_forward.3} parent=5 // pred_check_branch
        %505 = sbr.rel (%p503) target = $region84
      $region83: #{simple_composition_forward.3} parent=5 // pred_region
        // Predicated region
        $region85: #{simple_composition_forward.3} parent=83 // pred_check
          %p506 = pneg %p47
        $region86: #{simple_composition_forward.3} parent=83 // pred_check_branch
          %508 = sbr.rel (%p506) target = $region88
        $region87: #{simple_composition_forward.3} parent=83 // pred_region
          %s509 = smul.u32 2, %s27
          %p510 = scmp.lt.s32.totalorder %s509, 3
          %s511 = scalar_select %p510, %s509, 3
          %s512 = smul.addr %s511, 8
          %s513 = scalar_lea.vmem %s0, %s512
          %s514 = smul.u32 2, %s27
        $region88: #{simple_composition_forward.3} parent=83 // pred_fallthru
          _
      $region84: #{simple_composition_forward.3} parent=5 // pred_fallthru
        _
      %p515 = scmp.le.s32.totalorder 1, %s27
      %p516 = scmp.lt.s32.totalorder %s27, 3
      %p517 = pnand %p515, %p516
      %p518 = pneg %p517
      // Predicated region
      $region89: #{simple_composition_forward.3} parent=5 // pred_check
        _
      $region90: #{simple_composition_forward.3} parent=5 // pred_check_branch
        %520 = sbr.rel (%p517) target = $region92
      $region91: #{simple_composition_forward.3} parent=5 // pred_region
        %s521 = ssub.s32 %s27, 1
        %s522 = smul.u32 2, %s32
        %p523 = scmp.lt.s32.totalorder %s522, 3
        %s524 = scalar_select %p523, %s522, 3
        %s525 = smul.addr %s524, 8
        %s526 = scalar_lea.vmem %s0, %s525
        %p527 = pneg %p53
        %p528 = pneg %p50
        %p529 = pneg %p74
        %p530 = pneg %p71
        %p531 = pneg %p95
        %p532 = pneg %p92
        %p533 = pneg %p116
        %p534 = pneg %p113
        %p535 = pneg %p137
        %p536 = pneg %p134
        %p537 = pneg %p158
        %p538 = pneg %p155
        %p539 = pneg %p179
        %p540 = pneg %p176
        %p541 = pneg %p200
        %p542 = pneg %p197
        %p543 = pneg %p221
        %p544 = pneg %p218
        %p545 = pneg %p242
        %p546 = pneg %p239
        %p547 = pneg %p263
        %p548 = pneg %p260
        %p549 = pneg %p284
        %p550 = pneg %p281
        %p551 = pneg %p305
        %p552 = pneg %p302
        %p553 = pneg %p326
        %p554 = pneg %p323
        %p555 = pneg %p347
        %p556 = pneg %p344
        %p557 = pneg %p368
        %p558 = pneg %p365
        %p559 = pneg %p389
        %p560 = pneg %p386
        %p561 = pneg %p410
        %p562 = pneg %p407
        %p563 = pneg %p436
        %p564 = pneg %p433
        %s565 = sand.u32 %s423, 1
        %s566 = scalar_lea.sflag [#allocation3], %s565
        %s567 = sand.u32 %s423, 1
        %s568 = scalar_lea.vmem [#allocation2], %s567
        %s569 = smul.u32 2, %s32
        %p570 = scmp.lt.s32.totalorder %s569, 3
        %s571 = scalar_select %p570, %s569, 3
        %s572 = smul.addr %s571, 8
        %s573 = scalar_lea.vmem %s0, %s572
        %s574 = smul.u32 2, %s32
        %v575 = vld [vmem:[%s573] sm:$0xff]
        %v576 = vld [vmem:[%s573 + $0x8] sm:$0xff]
        %v577 = vld [vmem:[%s2] sm:$0xff]
        %v578 = vld [vmem:[%s2 + $0x8] sm:$0xff]
        %v579 = vld [vmem:[%s2 + $0x10] sm:$0xff]
        %v580 = vld [vmem:[%s2 + $0x18] sm:$0xff]
        %v581 = vld [vmem:[%s2 + $0x20] sm:$0xff]
        %v582 = vld [vmem:[%s2 + $0x28] sm:$0xff]
        %v583 = vld [vmem:[%s2 + $0x30] sm:$0xff]
        %v584 = vld [vmem:[%s2 + $0x38] sm:$0xff]
        %v585 = vld [vmem:[%s2 + $0x40] sm:$0xff]
        %v586 = vld [vmem:[%s2 + $0x48] sm:$0xff]
        %v587 = vld [vmem:[%s2 + $0x50] sm:$0xff]
        %v588 = vld [vmem:[%s2 + $0x58] sm:$0xff]
        %v589 = vld [vmem:[%s2 + $0x60] sm:$0xff]
        %v590 = vld [vmem:[%s2 + $0x68] sm:$0xff]
        %v591 = vld [vmem:[%s2 + $0x70] sm:$0xff]
        %v592 = vld [vmem:[%s2 + $0x78] sm:$0xff]
        %v593 = vld [vmem:[%s3] sm:$0x1]
        %v595 = vperm.slane %v593, 0
        %597 = vmatpush.msra.mxu0 %v592
        %598 = vmatpush.msra.mxu0 %v591
        %599 = vmatpush.msra.mxu0 %v590
        %600 = vmatpush.msra.mxu0 %v589
        %601 = vmatpush.msra.mxu0 %v588
        %602 = vmatpush.msra.mxu0 %v587
        %603 = vmatpush.msra.mxu0 %v586
        %604 = vmatpush.msra.mxu0 %v585
        %605 = vmatpush.msra.mxu0 %v584
        %606 = vmatpush.msra.mxu0 %v583
        %607 = vmatpush.msra.mxu0 %v582
        %608 = vmatpush.msra.mxu0 %v581
        %609 = vmatpush.msra.mxu0 %v580
        %610 = vmatpush.msra.mxu0 %v579
        %611 = vmatpush.msra.mxu0 %v578
        %612 = vmatpush.msra.mxu0 %v577
        %613 = vmatmul.f32.gmra.mxu0 %v575
        %v614 = vpop.f32.mrf.mxu0
        %v615 = vadd.f32 %v595, %v614
        %616 = vmatmul.f32.gmra.mxu0 %v576
        %v617 = vpop.f32.mrf.mxu0
        %v618 = vadd.f32 %v595, %v617
        %619 = vdwg.mxu0
        %v620 = vld [vmem:[%s1] sm:$0xff]
        %v621 = vld [vmem:[%s1 + $0x8] sm:$0xff]
        %v622 = vadd.f32 %v615, %v620
        %v623 = vadd.f32 %v618, %v621
        %v624 = vld [vmem:[%s4] sm:$0x1]
        %v625 = vld [vmem:[%s5] sm:$0x1]
        %vm626 = vcmask 523264
        %v627 = vsel %vm626, %v622, 0.0
        %628 = vadd.xlane.f32.xlu0 %v627
        %v629 = vpop.xlane.xlu0 %628
        %v630 = vsel %vm626, %v623, 0.0
        %631 = vadd.xlane.f32.xlu0 %v630
        %v632 = vpop.xlane.xlu0 %631
        %v633 = vrcp.pop 64.0
        %v634 = vmul.f32 64.0, %v633
        %v635 = vsub.f32 1.0, %v634
        %v636 = vmul.f32 %v633, %v635
        %v637 = vadd.f32 %v633, %v636
        %vm638 = vweird.f32 %v633
        %v639 = vsel %vm638, %v633, %v637
        %v640 = vmul.f32 %v629, %v639
        %v641 = vmul.f32 %v632, %v639
        %v642 = vsub.f32 %v622, %v640
        %v643 = vsub.f32 %v623, %v641
        %v644 = vmul.f32 %v642, %v642
        %v645 = vmul.f32 %v643, %v643
        %v646 = vsel %vm626, %v644, 0.0
        %647 = vadd.xlane.f32.xlu0 %v646
        %v648 = vpop.xlane.xlu0 %647
        %v649 = vsel %vm626, %v645, 0.0
        %650 = vadd.xlane.f32.xlu0 %v649
        %v651 = vpop.xlane.xlu0 %650
        %v652 = vmul.f32 %v648, %v639
        %v653 = vmul.f32 %v651, %v639
        %v654 = vadd.f32 %v652, 1e-05
        %v655 = vadd.f32 %v653, 1e-05
        %v656 = vrsqrt.pop %v654
        %v657 = vmul.f32 %v656, %v654
        %v658 = vmul.f32 %v657, %v656
        %v659 = vmul.f32 0.5, %v658
        %v660 = vsub.f32 1.5, %v659
        %v661 = vmul.f32 %v656, %v660
        %vm662 = vweird.f32 %v654
        %vm663 = vweird.f32 %v656
        %vm664 = vmor %vm662, %vm663
        %v665 = vsel %vm664, %v656, %v661
        %v666 = vrsqrt.pop %v655
        %v667 = vmul.f32 %v666, %v655
        %v668 = vmul.f32 %v667, %v666
        %v669 = vmul.f32 0.5, %v668
        %v670 = vsub.f32 1.5, %v669
        %v671 = vmul.f32 %v666, %v670
        %vm672 = vweird.f32 %v655
        %vm673 = vweird.f32 %v666
        %vm674 = vmor %vm672, %vm673
        %v675 = vsel %vm674, %v666, %v671
        %v676 = vmul.f32 %v642, %v665
        %v677 = vmul.f32 %v643, %v675
        %v679 = vperm.slane %v624, 0
        %v681 = vmul.f32 %v676, %v679
        %v682 = vmul.f32 %v677, %v679
        %v684 = vperm.slane %v625, 0
        %v686 = vadd.f32 %v681, %v684
        %v687 = vadd.f32 %v682, %v684
        %v688 = vld [vmem:[%s6] sm:$0xff]
        %v689 = vld [vmem:[%s6 + $0x8] sm:$0xff]
        %v690 = vld [vmem:[%s6 + $0x10] sm:$0xff]
        %v691 = vld [vmem:[%s6 + $0x18] sm:$0xff]
        %v692 = vld [vmem:[%s6 + $0x20] sm:$0xff]
        %v693 = vld [vmem:[%s6 + $0x28] sm:$0xff]
        %v694 = vld [vmem:[%s6 + $0x30] sm:$0xff]
        %v695 = vld [vmem:[%s6 + $0x38] sm:$0xff]
        %v696 = vld [vmem:[%s6 + $0x40] sm:$0xff]
        %v697 = vld [vmem:[%s6 + $0x48] sm:$0xff]
        %v698 = vld [vmem:[%s6 + $0x50] sm:$0xff]
        %v699 = vld [vmem:[%s6 + $0x58] sm:$0xff]
        %v700 = vld [vmem:[%s6 + $0x60] sm:$0xff]
        %v701 = vld [vmem:[%s6 + $0x68] sm:$0xff]
        %v702 = vld [vmem:[%s6 + $0x70] sm:$0xff]
        %v703 = vld [vmem:[%s6 + $0x78] sm:$0xff]
        %v704 = vld [vmem:[%s7] sm:$0x3]
        %v706 = vperm.slane %v704, 0
        %v707 = vperm.slane %v704, 1
        %v711 = vsel %vm626, %v686, 0
        %v714 = vsel %vm626, %v687, 0
        %716 = vmatpush.msra.mxu0 0.0
        %717 = vmatpush.msra.mxu0 0.0
        %718 = vmatpush.msra.mxu0 0.0
        %719 = vmatpush.msra.mxu0 0.0
        %720 = vmatpush.msra.mxu0 0.0
        %721 = vmatpush.msra.mxu0 0.0
        %722 = vmatpush.msra.mxu0 0.0
        %723 = vmatpush.msra.mxu0 0.0
        %724 = vmatpush.msra.mxu0 %v702
        %725 = vmatpush.msra.mxu0 %v700
        %726 = vmatpush.msra.mxu0 %v698
        %727 = vmatpush.msra.mxu0 %v696
        %728 = vmatpush.msra.mxu0 %v694
        %729 = vmatpush.msra.mxu0 %v692
        %730 = vmatpush.msra.mxu0 %v690
        %731 = vmatpush.msra.mxu0 %v688
        %732 = vmatmul.f32.gmra.mxu0 %v711
        %v733 = vpop.f32.mrf.mxu0
        %v734 = vadd.f32 %v706, %v733
        %735 = vmatmul.f32.gmra.mxu0 %v714
        %v736 = vpop.f32.mrf.mxu0
        %v737 = vadd.f32 %v706, %v736
        %738 = vdwg.mxu0
        %739 = vmatpush.msra.mxu0 0.0
        %740 = vmatpush.msra.mxu0 0.0
        %741 = vmatpush.msra.mxu0 0.0
        %742 = vmatpush.msra.mxu0 0.0
        %743 = vmatpush.msra.mxu0 0.0
        %744 = vmatpush.msra.mxu0 0.0
        %745 = vmatpush.msra.mxu0 0.0
        %746 = vmatpush.msra.mxu0 0.0
        %747 = vmatpush.msra.mxu0 %v703
        %748 = vmatpush.msra.mxu0 %v701
        %749 = vmatpush.msra.mxu0 %v699
        %750 = vmatpush.msra.mxu0 %v697
        %751 = vmatpush.msra.mxu0 %v695
        %752 = vmatpush.msra.mxu0 %v693
        %753 = vmatpush.msra.mxu0 %v691
        %754 = vmatpush.msra.mxu0 %v689
        %755 = vmatmul.f32.gmra.mxu0 %v711
        %v756 = vpop.f32.mrf.mxu0
        %v757 = vadd.f32 %v707, %v756
        %758 = vmatmul.f32.gmra.mxu0 %v714
        %v759 = vpop.f32.mrf.mxu0
        %v760 = vadd.f32 %v707, %v759
        %761 = vdwg.mxu0
        %v762 = vld [vmem:[%s8] sm:$0xff]
        %v763 = vld [vmem:[%s8 + $0x8] sm:$0xff]
        %v764 = vld [vmem:[%s8 + $0x10] sm:$0xff]
        %v765 = vld [vmem:[%s8 + $0x18] sm:$0xff]
        %v766 = vld [vmem:[%s8 + $0x20] sm:$0xff]
        %v767 = vld [vmem:[%s8 + $0x28] sm:$0xff]
        %v768 = vld [vmem:[%s8 + $0x30] sm:$0xff]
        %v769 = vld [vmem:[%s8 + $0x38] sm:$0xff]
        %772 = vrot.lane.b32.xlu0 %v734, 64
        %v773 = vpop.permute.xlu0 %772
        %774 = vrot.lane.b32.xlu0 %v737, 64
        %v775 = vpop.permute.xlu0 %774
        %vm776 = vcmask 130048
        %v777 = vsel %vm776, %v734, 0
        %v779 = vsel %vm776, %v737, 0
        %v781 = vsel %vm776, %v773, 0
        %v783 = vsel %vm776, %v775, 0
        %785 = vmatpush.xpose.msra.mxu0 0.0
        %786 = vmatpush.xpose.msra.mxu0 0.0
        %787 = vmatpush.xpose.msra.mxu0 0.0
        %788 = vmatpush.xpose.msra.mxu0 0.0
        %789 = vmatpush.xpose.msra.mxu0 0.0
        %790 = vmatpush.xpose.msra.mxu0 0.0
        %791 = vmatpush.xpose.msra.mxu0 0.0
        %792 = vmatpush.xpose.msra.mxu0 0.0
        %793 = vmatpush.xpose.msra.mxu0 0.0
        %794 = vmatpush.xpose.msra.mxu0 0.0
        %795 = vmatpush.xpose.msra.mxu0 0.0
        %796 = vmatpush.xpose.msra.mxu0 0.0
        %797 = vmatpush.xpose.msra.mxu0 0.0
        %798 = vmatpush.xpose.msra.mxu0 0.0
        %799 = vmatpush.xpose.msra.mxu0 %v783
        %800 = vmatpush.xpose.msra.mxu0 %v781
        %801 = vmatmul.f32.gmra.mxu0 %v777
        %v802 = vpop.f32.mrf.mxu0
        %v803 = vadd.f32 0.0, %v802
        %804 = vmatmul.f32.gmra.mxu0 %v779
        %v805 = vpop.f32.mrf.mxu0
        %v806 = vadd.f32 0.0, %v805
        %807 = vdwg.mxu0
        %v808 = vmul.f32 %v803, 0.25
        %v809 = vmul.f32 %v806, 0.25
        %v810 = vsel %vm776, %v808, -inf
        %811 = vmax.xlane.f32.xlu0 %v810
        %v812 = vpop.xlane.xlu0 %811
        %v813 = vsel %vm776, %v809, -inf
        %814 = vmax.xlane.f32.xlu0 %v813
        %v815 = vpop.xlane.xlu0 %814
        %v816 = vsub.f32 %v808, %v812
        %v817 = vsub.f32 %v809, %v815
        %v818 = vmul.f32 %v816, 1.442695
        %v819 = vpow.pop %v818
        %v820 = vmul.f32 %v817, 1.442695
        %v821 = vpow.pop %v820
        %v822 = vsel %vm776, %v819, 0.0
        %823 = vadd.xlane.f32.xlu0 %v822
        %v824 = vpop.xlane.xlu0 %823
        %v825 = vsel %vm776, %v821, 0.0
        %826 = vadd.xlane.f32.xlu0 %v825
        %v827 = vpop.xlane.xlu0 %826
        %v829 = vsel %vm776, %v819, 0
        %v832 = vsel %vm776, %v821, 0
        %834 = vmatpush.msra.mxu0 0.0
        %835 = vmatpush.msra.mxu0 0.0
        %836 = vmatpush.msra.mxu0 0.0
        %837 = vmatpush.msra.mxu0 0.0
        %838 = vmatpush.msra.mxu0 0.0
        %839 = vmatpush.msra.mxu0 0.0
        %840 = vmatpush.msra.mxu0 0.0
        %841 = vmatpush.msra.mxu0 0.0
        %842 = vmatpush.msra.mxu0 0.0
        %843 = vmatpush.msra.mxu0 0.0
        %844 = vmatpush.msra.mxu0 0.0
        %845 = vmatpush.msra.mxu0 0.0
        %846 = vmatpush.msra.mxu0 0.0
        %847 = vmatpush.msra.mxu0 0.0
        %848 = vmatpush.msra.mxu0 %v760
        %849 = vmatpush.msra.mxu0 %v757
        %850 = vmatmul.f32.gmra.mxu0 %v829
        %v851 = vpop.f32.mrf.mxu0
        %v852 = vadd.f32 0.0, %v851
        %853 = vmatmul.f32.gmra.mxu0 %v832
        %v854 = vpop.f32.mrf.mxu0
        %v855 = vadd.f32 0.0, %v854
        %856 = vdwg.mxu0
        %v857 = vrcp.pop %v824
        %v858 = vrcp.pop %v827
        %v859 = vmul.f32 %v852, %v857
        %v860 = vmul.f32 %v855, %v858
        %861 = vrot.lane.b32.xlu0 %v734, 112
        %v862 = vpop.permute.xlu0 %861
        %863 = vrot.lane.b32.xlu0 %v737, 112
        %v864 = vpop.permute.xlu0 %863
        %865 = vrot.lane.b32.xlu0 %v734, 48
        %v866 = vpop.permute.xlu0 %865
        %867 = vrot.lane.b32.xlu0 %v737, 48
        %v868 = vpop.permute.xlu0 %867
        %v869 = vsel %vm776, %v862, 0
        %v871 = vsel %vm776, %v864, 0
        %v873 = vsel %vm776, %v866, 0
        %v875 = vsel %vm776, %v868, 0
        %877 = vmatpush.xpose.msra.mxu0 0.0
        %878 = vmatpush.xpose.msra.mxu0 0.0
        %879 = vmatpush.xpose.msra.mxu0 0.0
        %880 = vmatpush.xpose.msra.mxu0 0.0
        %881 = vmatpush.xpose.msra.mxu0 0.0
        %882 = vmatpush.xpose.msra.mxu0 0.0
        %883 = vmatpush.xpose.msra.mxu0 0.0
        %884 = vmatpush.xpose.msra.mxu0 0.0
        %885 = vmatpush.xpose.msra.mxu0 0.0
        %886 = vmatpush.xpose.msra.mxu0 0.0
        %887 = vmatpush.xpose.msra.mxu0 0.0
        %888 = vmatpush.xpose.msra.mxu0 0.0
        %889 = vmatpush.xpose.msra.mxu0 0.0
        %890 = vmatpush.xpose.msra.mxu0 0.0
        %891 = vmatpush.xpose.msra.mxu0 %v875
        %892 = vmatpush.xpose.msra.mxu0 %v873
        %893 = vmatmul.f32.gmra.mxu0 %v869
        %v894 = vpop.f32.mrf.mxu0
        %v895 = vadd.f32 0.0, %v894
        %896 = vmatmul.f32.gmra.mxu0 %v871
        %v897 = vpop.f32.mrf.mxu0
        %v898 = vadd.f32 0.0, %v897
        %899 = vdwg.mxu0
        %v900 = vmul.f32 %v895, 0.25
        %v901 = vmul.f32 %v898, 0.25
        %v902 = vsel %vm776, %v900, -inf
        %903 = vmax.xlane.f32.xlu0 %v902
        %v904 = vpop.xlane.xlu0 %903
        %v905 = vsel %vm776, %v901, -inf
        %906 = vmax.xlane.f32.xlu0 %v905
        %v907 = vpop.xlane.xlu0 %906
        %v908 = vsub.f32 %v900, %v904
        %v909 = vsub.f32 %v901, %v907
        %v910 = vmul.f32 %v908, 1.442695
        %v911 = vpow.pop %v910
        %v912 = vmul.f32 %v909, 1.442695
        %v913 = vpow.pop %v912
        %v914 = vsel %vm776, %v911, 0.0
        %915 = vadd.xlane.f32.xlu0 %v914
        %v916 = vpop.xlane.xlu0 %915
        %v917 = vsel %vm776, %v913, 0.0
        %918 = vadd.xlane.f32.xlu0 %v917
        %v919 = vpop.xlane.xlu0 %918
        %922 = vrot.lane.b32.xlu0 %v757, 112
        %v923 = vpop.permute.xlu0 %922
        %924 = vrot.lane.b32.xlu0 %v760, 112
        %v925 = vpop.permute.xlu0 %924
        %v929 = vsel %vm776, %v911, 0
        %v932 = vsel %vm776, %v913, 0
        %934 = vmatpush.msra.mxu0 0.0
        %935 = vmatpush.msra.mxu0 0.0
        %936 = vmatpush.msra.mxu0 0.0
        %937 = vmatpush.msra.mxu0 0.0
        %938 = vmatpush.msra.mxu0 0.0
        %939 = vmatpush.msra.mxu0 0.0
        %940 = vmatpush.msra.mxu0 0.0
        %941 = vmatpush.msra.mxu0 0.0
        %942 = vmatpush.msra.mxu0 0.0
        %943 = vmatpush.msra.mxu0 0.0
        %944 = vmatpush.msra.mxu0 0.0
        %945 = vmatpush.msra.mxu0 0.0
        %946 = vmatpush.msra.mxu0 0.0
        %947 = vmatpush.msra.mxu0 0.0
        %948 = vmatpush.msra.mxu0 %v925
        %949 = vmatpush.msra.mxu0 %v923
        %950 = vmatmul.f32.gmra.mxu0 %v929
        %v951 = vpop.f32.mrf.mxu0
        %v952 = vadd.f32 0.0, %v951
        %953 = vmatmul.f32.gmra.mxu0 %v932
        %v954 = vpop.f32.mrf.mxu0
        %v955 = vadd.f32 0.0, %v954
        %956 = vdwg.mxu0
        %v957 = vrcp.pop %v916
        %v958 = vrcp.pop %v919
        %v959 = vmul.f32 %v952, %v957
        %v960 = vmul.f32 %v955, %v958
        %v962 = vsel %vm776, %v959, 0
        %v965 = vsel %vm776, %v960, 0
        %967 = vmatpush.msra.mxu0 0.0
        %968 = vmatpush.msra.mxu0 0.0
        %969 = vmatpush.msra.mxu0 0.0
        %970 = vmatpush.msra.mxu0 0.0
        %971 = vmatpush.msra.mxu0 0.0
        %972 = vmatpush.msra.mxu0 0.0
        %973 = vmatpush.msra.mxu0 0.0
        %974 = vmatpush.msra.mxu0 0.0
        %975 = vmatpush.msra.mxu0 0.0
        %976 = vmatpush.msra.mxu0 0.0
        %977 = vmatpush.msra.mxu0 0.0
        %978 = vmatpush.msra.mxu0 0.0
        %979 = vmatpush.msra.mxu0 0.0
        %980 = vmatpush.msra.mxu0 0.0
        %981 = vmatpush.msra.mxu0 %v765
        %982 = vmatpush.msra.mxu0 %v764
        %983 = vmatmul.f32.gmra.mxu0 %v962
        %v984 = vpop.f32.mrf.mxu0
        %v985 = vadd.f32 0.0, %v984
        %986 = vmatmul.f32.gmra.mxu0 %v965
        %v987 = vpop.f32.mrf.mxu0
        %v988 = vadd.f32 0.0, %v987
        %989 = vdwg.mxu0
        %v991 = vsel %vm776, %v859, 0
        %v994 = vsel %vm776, %v860, 0
        %996 = vmatpush.msra.mxu0 0.0
        %997 = vmatpush.msra.mxu0 0.0
        %998 = vmatpush.msra.mxu0 0.0
        %999 = vmatpush.msra.mxu0 0.0
        %1000 = vmatpush.msra.mxu0 0.0
        %1001 = vmatpush.msra.mxu0 0.0
        %1002 = vmatpush.msra.mxu0 0.0
        %1003 = vmatpush.msra.mxu0 0.0
        %1004 = vmatpush.msra.mxu0 0.0
        %1005 = vmatpush.msra.mxu0 0.0
        %1006 = vmatpush.msra.mxu0 0.0
        %1007 = vmatpush.msra.mxu0 0.0
        %1008 = vmatpush.msra.mxu0 0.0
        %1009 = vmatpush.msra.mxu0 0.0
        %1010 = vmatpush.msra.mxu0 %v763
        %1011 = vmatpush.msra.mxu0 %v762
        %1012 = vmatmul.f32.gmra.mxu0 %v991
        %v1013 = vpop.f32.mrf.mxu0
        %v1014 = vadd.f32 %v985, %v1013
        %1015 = vmatmul.f32.gmra.mxu0 %v994
        %v1016 = vpop.f32.mrf.mxu0
        %v1017 = vadd.f32 %v988, %v1016
        %1018 = vdwg.mxu0
        %1019 = vrot.lane.b32.xlu0 %v734, 96
        %v1020 = vpop.permute.xlu0 %1019
        %1021 = vrot.lane.b32.xlu0 %v737, 96
        %v1022 = vpop.permute.xlu0 %1021
        %1023 = vrot.lane.b32.xlu0 %v734, 32
        %v1024 = vpop.permute.xlu0 %1023
        %1025 = vrot.lane.b32.xlu0 %v737, 32
        %v1026 = vpop.permute.xlu0 %1025
        %v1027 = vsel %vm776, %v1020, 0
        %v1029 = vsel %vm776, %v1022, 0
        %v1031 = vsel %vm776, %v1024, 0
        %v1033 = vsel %vm776, %v1026, 0
        %1035 = vmatpush.xpose.msra.mxu0 0.0
        %1036 = vmatpush.xpose.msra.mxu0 0.0
        %1037 = vmatpush.xpose.msra.mxu0 0.0
        %1038 = vmatpush.xpose.msra.mxu0 0.0
        %1039 = vmatpush.xpose.msra.mxu0 0.0
        %1040 = vmatpush.xpose.msra.mxu0 0.0
        %1041 = vmatpush.xpose.msra.mxu0 0.0
        %1042 = vmatpush.xpose.msra.mxu0 0.0
        %1043 = vmatpush.xpose.msra.mxu0 0.0
        %1044 = vmatpush.xpose.msra.mxu0 0.0
        %1045 = vmatpush.xpose.msra.mxu0 0.0
        %1046 = vmatpush.xpose.msra.mxu0 0.0
        %1047 = vmatpush.xpose.msra.mxu0 0.0
        %1048 = vmatpush.xpose.msra.mxu0 0.0
        %1049 = vmatpush.xpose.msra.mxu0 %v1033
        %1050 = vmatpush.xpose.msra.mxu0 %v1031
        %1051 = vmatmul.f32.gmra.mxu0 %v1027
        %v1052 = vpop.f32.mrf.mxu0
        %v1053 = vadd.f32 0.0, %v1052
        %1054 = vmatmul.f32.gmra.mxu0 %v1029
        %v1055 = vpop.f32.mrf.mxu0
        %v1056 = vadd.f32 0.0, %v1055
        %1057 = vdwg.mxu0
        %v1058 = vmul.f32 %v1053, 0.25
        %v1059 = vmul.f32 %v1056, 0.25
        %v1060 = vsel %vm776, %v1058, -inf
        %1061 = vmax.xlane.f32.xlu0 %v1060
        %v1062 = vpop.xlane.xlu0 %1061
        %v1063 = vsel %vm776, %v1059, -inf
        %1064 = vmax.xlane.f32.xlu0 %v1063
        %v1065 = vpop.xlane.xlu0 %1064
        %v1066 = vsub.f32 %v1058, %v1062
        %v1067 = vsub.f32 %v1059, %v1065
        %v1068 = vmul.f32 %v1066, 1.442695
        %v1069 = vpow.pop %v1068
        %v1070 = vmul.f32 %v1067, 1.442695
        %v1071 = vpow.pop %v1070
        %v1072 = vsel %vm776, %v1069, 0.0
        %1073 = vadd.xlane.f32.xlu0 %v1072
        %v1074 = vpop.xlane.xlu0 %1073
        %v1075 = vsel %vm776, %v1071, 0.0
        %1076 = vadd.xlane.f32.xlu0 %v1075
        %v1077 = vpop.xlane.xlu0 %1076
        %1078 = vrot.lane.b32.xlu0 %v757, 96
        %v1079 = vpop.permute.xlu0 %1078
        %1080 = vrot.lane.b32.xlu0 %v760, 96
        %v1081 = vpop.permute.xlu0 %1080
        %v1085 = vsel %vm776, %v1069, 0
        %v1088 = vsel %vm776, %v1071, 0
        %1090 = vmatpush.msra.mxu0 0.0
        %1091 = vmatpush.msra.mxu0 0.0
        %1092 = vmatpush.msra.mxu0 0.0
        %1093 = vmatpush.msra.mxu0 0.0
        %1094 = vmatpush.msra.mxu0 0.0
        %1095 = vmatpush.msra.mxu0 0.0
        %1096 = vmatpush.msra.mxu0 0.0
        %1097 = vmatpush.msra.mxu0 0.0
        %1098 = vmatpush.msra.mxu0 0.0
        %1099 = vmatpush.msra.mxu0 0.0
        %1100 = vmatpush.msra.mxu0 0.0
        %1101 = vmatpush.msra.mxu0 0.0
        %1102 = vmatpush.msra.mxu0 0.0
        %1103 = vmatpush.msra.mxu0 0.0
        %1104 = vmatpush.msra.mxu0 %v1081
        %1105 = vmatpush.msra.mxu0 %v1079
        %1106 = vmatmul.f32.gmra.mxu0 %v1085
        %v1107 = vpop.f32.mrf.mxu0
        %v1108 = vadd.f32 0.0, %v1107
        %1109 = vmatmul.f32.gmra.mxu0 %v1088
        %v1110 = vpop.f32.mrf.mxu0
        %v1111 = vadd.f32 0.0, %v1110
        %1112 = vdwg.mxu0
        %v1113 = vrcp.pop %v1074
        %v1114 = vrcp.pop %v1077
        %v1115 = vmul.f32 %v1108, %v1113
        %v1116 = vmul.f32 %v1111, %v1114
        %v1118 = vsel %vm776, %v1115, 0
        %v1121 = vsel %vm776, %v1116, 0
        %1123 = vmatpush.msra.mxu0 0.0
        %1124 = vmatpush.msra.mxu0 0.0
        %1125 = vmatpush.msra.mxu0 0.0
        %1126 = vmatpush.msra.mxu0 0.0
        %1127 = vmatpush.msra.mxu0 0.0
        %1128 = vmatpush.msra.mxu0 0.0
        %1129 = vmatpush.msra.mxu0 0.0
        %1130 = vmatpush.msra.mxu0 0.0
        %1131 = vmatpush.msra.mxu0 0.0
        %1132 = vmatpush.msra.mxu0 0.0
        %1133 = vmatpush.msra.mxu0 0.0
        %1134 = vmatpush.msra.mxu0 0.0
        %1135 = vmatpush.msra.mxu0 0.0
        %1136 = vmatpush.msra.mxu0 0.0
        %1137 = vmatpush.msra.mxu0 %v767
        %1138 = vmatpush.msra.mxu0 %v766
        %1139 = vmatmul.f32.gmra.mxu0 %v1118
        %v1140 = vpop.f32.mrf.mxu0
        %v1141 = vadd.f32 0.0, %v1140
        %1142 = vmatmul.f32.gmra.mxu0 %v1121
        %v1143 = vpop.f32.mrf.mxu0
        %v1144 = vadd.f32 0.0, %v1143
        %1145 = vdwg.mxu0
        %v1146 = vadd.f32 %v1014, %v1141
        %v1147 = vadd.f32 %v1017, %v1144
        %1148 = vrot.lane.b32.xlu0 %v734, 80
        %v1149 = vpop.permute.xlu0 %1148
        %1150 = vrot.lane.b32.xlu0 %v737, 80
        %v1151 = vpop.permute.xlu0 %1150
        %1152 = vrot.lane.b32.xlu0 %v734, 16
        %v1153 = vpop.permute.xlu0 %1152
        %1154 = vrot.lane.b32.xlu0 %v737, 16
        %v1155 = vpop.permute.xlu0 %1154
        %v1156 = vsel %vm776, %v1149, 0
        %v1158 = vsel %vm776, %v1151, 0
        %v1160 = vsel %vm776, %v1153, 0
        %v1162 = vsel %vm776, %v1155, 0
        %1164 = vmatpush.xpose.msra.mxu0 0.0
        %1165 = vmatpush.xpose.msra.mxu0 0.0
        %1166 = vmatpush.xpose.msra.mxu0 0.0
        %1167 = vmatpush.xpose.msra.mxu0 0.0
        %1168 = vmatpush.xpose.msra.mxu0 0.0
        %1169 = vmatpush.xpose.msra.mxu0 0.0
        %1170 = vmatpush.xpose.msra.mxu0 0.0
        %1171 = vmatpush.xpose.msra.mxu0 0.0
        %1172 = vmatpush.xpose.msra.mxu0 0.0
        %1173 = vmatpush.xpose.msra.mxu0 0.0
        %1174 = vmatpush.xpose.msra.mxu0 0.0
        %1175 = vmatpush.xpose.msra.mxu0 0.0
        %1176 = vmatpush.xpose.msra.mxu0 0.0
        %1177 = vmatpush.xpose.msra.mxu0 0.0
        %1178 = vmatpush.xpose.msra.mxu0 %v1162
        %1179 = vmatpush.xpose.msra.mxu0 %v1160
        %1180 = vmatmul.f32.gmra.mxu0 %v1156
        %v1181 = vpop.f32.mrf.mxu0
        %v1182 = vadd.f32 0.0, %v1181
        %1183 = vmatmul.f32.gmra.mxu0 %v1158
        %v1184 = vpop.f32.mrf.mxu0
        %v1185 = vadd.f32 0.0, %v1184
        %1186 = vdwg.mxu0
        %v1187 = vmul.f32 %v1182, 0.25
        %v1188 = vmul.f32 %v1185, 0.25
        %v1189 = vsel %vm776, %v1187, -inf
        %1190 = vmax.xlane.f32.xlu0 %v1189
        %v1191 = vpop.xlane.xlu0 %1190
        %v1192 = vsel %vm776, %v1188, -inf
        %1193 = vmax.xlane.f32.xlu0 %v1192
        %v1194 = vpop.xlane.xlu0 %1193
        %v1195 = vsub.f32 %v1187, %v1191
        %v1196 = vsub.f32 %v1188, %v1194
        %v1197 = vmul.f32 %v1195, 1.442695
        %v1198 = vpow.pop %v1197
        %v1199 = vmul.f32 %v1196, 1.442695
        %v1200 = vpow.pop %v1199
        %v1201 = vsel %vm776, %v1198, 0.0
        %1202 = vadd.xlane.f32.xlu0 %v1201
        %v1203 = vpop.xlane.xlu0 %1202
        %v1204 = vsel %vm776, %v1200, 0.0
        %1205 = vadd.xlane.f32.xlu0 %v1204
        %v1206 = vpop.xlane.xlu0 %1205
        %1207 = vrot.lane.b32.xlu0 %v757, 80
        %v1208 = vpop.permute.xlu0 %1207
        %1209 = vrot.lane.b32.xlu0 %v760, 80
        %v1210 = vpop.permute.xlu0 %1209
        %v1214 = vsel %vm776, %v1198, 0
        %v1217 = vsel %vm776, %v1200, 0
        %1219 = vmatpush.msra.mxu0 0.0
        %1220 = vmatpush.msra.mxu0 0.0
        %1221 = vmatpush.msra.mxu0 0.0
        %1222 = vmatpush.msra.mxu0 0.0
        %1223 = vmatpush.msra.mxu0 0.0
        %1224 = vmatpush.msra.mxu0 0.0
        %1225 = vmatpush.msra.mxu0 0.0
        %1226 = vmatpush.msra.mxu0 0.0
        %1227 = vmatpush.msra.mxu0 0.0
        %1228 = vmatpush.msra.mxu0 0.0
        %1229 = vmatpush.msra.mxu0 0.0
        %1230 = vmatpush.msra.mxu0 0.0
        %1231 = vmatpush.msra.mxu0 0.0
        %1232 = vmatpush.msra.mxu0 0.0
        %1233 = vmatpush.msra.mxu0 %v1210
        %1234 = vmatpush.msra.mxu0 %v1208
        %1235 = vmatmul.f32.gmra.mxu0 %v1214
        %v1236 = vpop.f32.mrf.mxu0
        %v1237 = vadd.f32 0.0, %v1236
        %1238 = vmatmul.f32.gmra.mxu0 %v1217
        %v1239 = vpop.f32.mrf.mxu0
        %v1240 = vadd.f32 0.0, %v1239
        %1241 = vdwg.mxu0
        %v1242 = vrcp.pop %v1203
        %v1243 = vrcp.pop %v1206
        %v1244 = vmul.f32 %v1237, %v1242
        %v1245 = vmul.f32 %v1240, %v1243
        %v1247 = vsel %vm776, %v1244, 0
        %v1250 = vsel %vm776, %v1245, 0
        %1252 = vmatpush.msra.mxu0 0.0
        %1253 = vmatpush.msra.mxu0 0.0
        %1254 = vmatpush.msra.mxu0 0.0
        %1255 = vmatpush.msra.mxu0 0.0
        %1256 = vmatpush.msra.mxu0 0.0
        %1257 = vmatpush.msra.mxu0 0.0
        %1258 = vmatpush.msra.mxu0 0.0
        %1259 = vmatpush.msra.mxu0 0.0
        %1260 = vmatpush.msra.mxu0 0.0
        %1261 = vmatpush.msra.mxu0 0.0
        %1262 = vmatpush.msra.mxu0 0.0
        %1263 = vmatpush.msra.mxu0 0.0
        %1264 = vmatpush.msra.mxu0 0.0
        %1265 = vmatpush.msra.mxu0 0.0
        %1266 = vmatpush.msra.mxu0 %v769
        %1267 = vmatpush.msra.mxu0 %v768
        %1268 = vmatmul.f32.gmra.mxu0 %v1247
        %v1269 = vpop.f32.mrf.mxu0
        %v1270 = vadd.f32 0.0, %v1269
        %1271 = vmatmul.f32.gmra.mxu0 %v1250
        %v1272 = vpop.f32.mrf.mxu0
        %v1273 = vadd.f32 0.0, %v1272
        %1274 = vdwg.mxu0
        %v1275 = vadd.f32 %v1146, %v1270
        %v1276 = vadd.f32 %v1147, %v1273
        %v1277 = vld [vmem:[%s9] sm:$0x1]
        %v1279 = vperm.slane %v1277, 0
        %v1281 = vadd.f32 %v1275, %v1279
        %v1282 = vadd.f32 %v1276, %v1279
        %v1283 = vadd.f32 %v622, %v1281
        %v1284 = vadd.f32 %v623, %v1282
        %v1285 = vld [vmem:[%s10] sm:$0x1]
        %v1286 = vld [vmem:[%s11] sm:$0x1]
        %v1287 = vsel %vm626, %v1283, 0.0
        %1288 = vadd.xlane.f32.xlu0 %v1287
        %v1289 = vpop.xlane.xlu0 %1288
        %v1290 = vsel %vm626, %v1284, 0.0
        %1291 = vadd.xlane.f32.xlu0 %v1290
        %v1292 = vpop.xlane.xlu0 %1291
        %v1293 = vmul.f32 %v1289, %v639
        %v1294 = vmul.f32 %v1292, %v639
        %v1295 = vsub.f32 %v1283, %v1293
        %v1296 = vsub.f32 %v1284, %v1294
        %v1297 = vmul.f32 %v1295, %v1295
        %v1298 = vmul.f32 %v1296, %v1296
        %v1299 = vsel %vm626, %v1297, 0.0
        %1300 = vadd.xlane.f32.xlu0 %v1299
        %v1301 = vpop.xlane.xlu0 %1300
        %v1302 = vsel %vm626, %v1298, 0.0
        %1303 = vadd.xlane.f32.xlu0 %v1302
        %v1304 = vpop.xlane.xlu0 %1303
        %v1305 = vmul.f32 %v1301, %v639
        %v1306 = vmul.f32 %v1304, %v639
        %v1307 = vadd.f32 %v1305, 1e-05
        %v1308 = vadd.f32 %v1306, 1e-05
        %v1309 = vrsqrt.pop %v1307
        %v1310 = vmul.f32 %v1309, %v1307
        %v1311 = vmul.f32 %v1310, %v1309
        %v1312 = vmul.f32 0.5, %v1311
        %v1313 = vsub.f32 1.5, %v1312
        %v1314 = vmul.f32 %v1309, %v1313
        %vm1315 = vweird.f32 %v1307
        %vm1316 = vweird.f32 %v1309
        %vm1317 = vmor %vm1315, %vm1316
        %v1318 = vsel %vm1317, %v1309, %v1314
        %v1319 = vrsqrt.pop %v1308
        %v1320 = vmul.f32 %v1319, %v1308
        %v1321 = vmul.f32 %v1320, %v1319
        %v1322 = vmul.f32 0.5, %v1321
        %v1323 = vsub.f32 1.5, %v1322
        %v1324 = vmul.f32 %v1319, %v1323
        %vm1325 = vweird.f32 %v1308
        %vm1326 = vweird.f32 %v1319
        %vm1327 = vmor %vm1325, %vm1326
        %v1328 = vsel %vm1327, %v1319, %v1324
        %v1329 = vmul.f32 %v1295, %v1318
        %v1330 = vmul.f32 %v1296, %v1328
        %v1332 = vperm.slane %v1285, 0
        %v1334 = vmul.f32 %v1329, %v1332
        %v1335 = vmul.f32 %v1330, %v1332
        %v1337 = vperm.slane %v1286, 0
        %v1339 = vadd.f32 %v1334, %v1337
        %v1340 = vadd.f32 %v1335, %v1337
        %v1341 = vld [vmem:[%s12] sm:$0xff]
        %v1342 = vld [vmem:[%s12 + $0x8] sm:$0xff]
        %v1343 = vld [vmem:[%s12 + $0x10] sm:$0xff]
        %v1344 = vld [vmem:[%s12 + $0x18] sm:$0xff]
        %v1345 = vld [vmem:[%s12 + $0x20] sm:$0xff]
        %v1346 = vld [vmem:[%s12 + $0x28] sm:$0xff]
        %v1347 = vld [vmem:[%s12 + $0x30] sm:$0xff]
        %v1348 = vld [vmem:[%s12 + $0x38] sm:$0xff]
        %v1349 = vld [vmem:[%s13] sm:$0x1]
        %v1351 = vperm.slane %v1349, 0
        %v1354 = vsel %vm626, %v1339, 0
        %v1357 = vsel %vm626, %v1340, 0
        %1359 = vmatpush.msra.mxu0 0.0
        %1360 = vmatpush.msra.mxu0 0.0
        %1361 = vmatpush.msra.mxu0 0.0
        %1362 = vmatpush.msra.mxu0 0.0
        %1363 = vmatpush.msra.mxu0 0.0
        %1364 = vmatpush.msra.mxu0 0.0
        %1365 = vmatpush.msra.mxu0 0.0
        %1366 = vmatpush.msra.mxu0 0.0
        %1367 = vmatpush.msra.mxu0 %v1348
        %1368 = vmatpush.msra.mxu0 %v1347
        %1369 = vmatpush.msra.mxu0 %v1346
        %1370 = vmatpush.msra.mxu0 %v1345
        %1371 = vmatpush.msra.mxu0 %v1344
        %1372 = vmatpush.msra.mxu0 %v1343
        %1373 = vmatpush.msra.mxu0 %v1342
        %1374 = vmatpush.msra.mxu0 %v1341
        %1375 = vmatmul.f32.gmra.mxu0 %v1354
        %v1376 = vpop.f32.mrf.mxu0
        %v1377 = vadd.f32 %v1351, %v1376
        %1378 = vmatmul.f32.gmra.mxu0 %v1357
        %v1379 = vpop.f32.mrf.mxu0
        %v1380 = vadd.f32 %v1351, %v1379
        %1381 = vdwg.mxu0
        %v1382 = vmul.f32 %v1377, %v1377
        %v1383 = vmul.f32 %v1380, %v1380
        %v1384 = vmul.f32 %v1377, %v1382
        %v1385 = vmul.f32 %v1380, %v1383
        %v1386 = vmul.f32 %v1384, 0.044715
        %v1387 = vmul.f32 %v1385, 0.044715
        %v1388 = vadd.f32 %v1377, %v1386
        %v1389 = vadd.f32 %v1380, %v1387
        %v1390 = vmul.f32 %v1388, 0.7978846
        %v1391 = vmul.f32 %v1389, 0.7978846
        %v1392 = vtanh.pop %v1390
        %v1393 = vtanh.pop %v1391
        %v1394 = vadd.f32 %v1392, 1.0
        %v1395 = vadd.f32 %v1393, 1.0
        %v1396 = vmul.f32 %v1394, 0.5
        %v1397 = vmul.f32 %v1395, 0.5
        %v1398 = vmul.f32 %v1377, %v1396
        %v1399 = vmul.f32 %v1380, %v1397
        %v1400 = vld [vmem:[%s14] sm:$0xff]
        %v1401 = vld [vmem:[%s14 + $0x8] sm:$0xff]
        %v1402 = vld [vmem:[%s14 + $0x10] sm:$0xff]
        %v1403 = vld [vmem:[%s14 + $0x18] sm:$0xff]
        %v1404 = vld [vmem:[%s14 + $0x20] sm:$0xff]
        %v1405 = vld [vmem:[%s14 + $0x28] sm:$0xff]
        %v1406 = vld [vmem:[%s14 + $0x30] sm:$0xff]
        %v1407 = vld [vmem:[%s14 + $0x38] sm:$0xff]
        %v1408 = vld [vmem:[%s14 + $0x40] sm:$0xff]
        %v1409 = vld [vmem:[%s14 + $0x48] sm:$0xff]
        %v1410 = vld [vmem:[%s14 + $0x50] sm:$0xff]
        %v1411 = vld [vmem:[%s14 + $0x58] sm:$0xff]
        %v1412 = vld [vmem:[%s14 + $0x60] sm:$0xff]
        %v1413 = vld [vmem:[%s14 + $0x68] sm:$0xff]
        %v1414 = vld [vmem:[%s14 + $0x70] sm:$0xff]
        %v1415 = vld [vmem:[%s14 + $0x78] sm:$0xff]
        %v1416 = vld [vmem:[%s15] sm:$0x1]
        %v1418 = vperm.slane %v1416, 0
        %1420 = vmatpush.msra.mxu0 %v1415
        %1421 = vmatpush.msra.mxu0 %v1414
        %1422 = vmatpush.msra.mxu0 %v1413
        %1423 = vmatpush.msra.mxu0 %v1412
        %1424 = vmatpush.msra.mxu0 %v1411
        %1425 = vmatpush.msra.mxu0 %v1410
        %1426 = vmatpush.msra.mxu0 %v1409
        %1427 = vmatpush.msra.mxu0 %v1408
        %1428 = vmatpush.msra.mxu0 %v1407
        %1429 = vmatpush.msra.mxu0 %v1406
        %1430 = vmatpush.msra.mxu0 %v1405
        %1431 = vmatpush.msra.mxu0 %v1404
        %1432 = vmatpush.msra.mxu0 %v1403
        %1433 = vmatpush.msra.mxu0 %v1402
        %1434 = vmatpush.msra.mxu0 %v1401
        %1435 = vmatpush.msra.mxu0 %v1400
        %1436 = vmatmul.f32.gmra.mxu0 %v1398
        %v1437 = vpop.f32.mrf.mxu0
        %v1438 = vadd.f32 %v1418, %v1437
        %1439 = vmatmul.f32.gmra.mxu0 %v1399
        %v1440 = vpop.f32.mrf.mxu0
        %v1441 = vadd.f32 %v1418, %v1440
        %1442 = vdwg.mxu0
        %v1443 = vadd.f32 %v1283, %v1438
        %v1444 = vadd.f32 %v1284, %v1441
        %v1445 = vsel %vm626, %v1443, 0.0
        %v1446 = vsel %vm626, %v1444, 0.0
        %v1447 = vadd.f32 %v1445, %v1446
        %v1448 = vrot.slane %v1447, 4
        %v1449 = vadd.f32 %v1447, %v1448
        %v1450 = vrot.slane %v1449, 2
        %v1451 = vadd.f32 %v1449, %v1450
        %v1452 = vrot.slane %v1451, 1
        %v1453 = vadd.f32 %v1451, %v1452
        %v1454 = vrcp.pop 16.0
        %v1455 = vmul.f32 16.0, %v1454
        %v1456 = vsub.f32 1.0, %v1455
        %v1457 = vmul.f32 %v1454, %v1456
        %v1458 = vadd.f32 %v1454, %v1457
        %vm1459 = vweird.f32 %v1454
        %v1460 = vsel %vm1459, %v1454, %v1458
        %v1461 = vmul.f32 %v1453, %v1460
        %v1462 = vld [vmem:[%s16] sm:$0xff]
        %v1463 = vld [vmem:[%s16 + $0x8] sm:$0xff]
        %v1464 = vld [vmem:[%s16 + $0x10] sm:$0xff]
        %v1465 = vld [vmem:[%s16 + $0x18] sm:$0xff]
        %v1466 = vld [vmem:[%s16 + $0x20] sm:$0xff]
        %v1467 = vld [vmem:[%s16 + $0x28] sm:$0xff]
        %v1468 = vld [vmem:[%s16 + $0x30] sm:$0xff]
        %v1469 = vld [vmem:[%s16 + $0x38] sm:$0xff]
        %v1470 = vld [vmem:[%s17] sm:$0x1]
        %v1472 = vsel %vm626, %v1461, 0
        %1474 = vmatpush.msra.mxu0 0.0
        %1475 = vmatpush.msra.mxu0 0.0
        %1476 = vmatpush.msra.mxu0 0.0
        %1477 = vmatpush.msra.mxu0 0.0
        %1478 = vmatpush.msra.mxu0 0.0
        %1479 = vmatpush.msra.mxu0 0.0
        %1480 = vmatpush.msra.mxu0 0.0
        %1481 = vmatpush.msra.mxu0 0.0
        %1482 = vmatpush.msra.mxu0 %v1469
        %1483 = vmatpush.msra.mxu0 %v1468
        %1484 = vmatpush.msra.mxu0 %v1467
        %1485 = vmatpush.msra.mxu0 %v1466
        %1486 = vmatpush.msra.mxu0 %v1465
        %1487 = vmatpush.msra.mxu0 %v1464
        %1488 = vmatpush.msra.mxu0 %v1463
        %1489 = vmatpush.msra.mxu0 %v1462
        %1490 = vmatmul.f32.gmra.mxu0 %v1472
        %v1491 = vpop.f32.mrf.mxu0
        %v1492 = vadd.f32 %v1470, %v1491
        %1493 = vdwg.mxu0
        %vm1494 = vcmask 73728
        %1495 = vst.msk [vmem:[%s568] sm:$0x1] %vm1494, %v1492
        %s1496 = sand.u32 %s423, 1
        %s1497 = scalar_lea.sflag [#allocation3], %s1496
        %s1498 = sand.u32 %s423, 1
        %s1499 = scalar_lea.vmem [#allocation2], %s1498
        // Predicated region
        $region93: #{simple_composition_forward.3} parent=91 // pred_check
          %p1500 = pneg %p433
        $region94: #{simple_composition_forward.3} parent=91 // pred_check_branch
          %1502 = sbr.rel (%p1500) target = $region96
        $region95: #{simple_composition_forward.3} parent=91 // pred_region
          %1504 = vsyncadd %s1497, 0
          %s1505 = scalar_lea.hbm %s18, %s32
          %s1507 = sshll.u32 %s1499, 4
          %s1508 = int_to_ptr.vmem [resolvable:$true] %s1507
          %s1509 = sshll.u32 %s1505, 4
          %s1510 = int_to_ptr.hbm [resolvable:$true] %s1509
          %1512 = dma.vmem_to_hbm [thread:$0]  %s1508, 16, %s1510, %s1497
        $region96: #{simple_composition_forward.3} parent=91 // pred_fallthru
          _
      $region92: #{simple_composition_forward.3} parent=5 // pred_fallthru
        _
      %p1513 = scmp.le.s32.totalorder 2, %s27
      // Predicated region
      $region97: #{simple_composition_forward.3} parent=5 // pred_check
        %p1514 = pneg %p1513
      $region98: #{simple_composition_forward.3} parent=5 // pred_check_branch
        %1516 = sbr.rel (%p1514) target = $region100
      $region99: #{simple_composition_forward.3} parent=5 // pred_region
        %s1517 = ssub.s32 %s27, 2
        // Predicated region
        $region101: #{simple_composition_forward.3} parent=99 // pred_check
          %p1518 = pneg %p439
        $region102: #{simple_composition_forward.3} parent=99 // pred_check_branch
          %1520 = sbr.rel (%p1518) target = $region104
        $region103: #{simple_composition_forward.3} parent=99 // pred_region
          %s1521 = sand.u32 %s424, 1
          %s1522 = scalar_lea.sflag [#allocation3], %s1521
          %s1523 = sand.u32 %s424, 1
          %s1524 = scalar_lea.vmem [#allocation2], %s1523
          %1526 = dma.done %s1522, 16
        $region104: #{simple_composition_forward.3} parent=99 // pred_fallthru
          _
      $region100: #{simple_composition_forward.3} parent=5 // pred_fallthru
        _
    $region6: #{simple_composition_forward.3} parent=1 // loop_footer
      %s31 = sadd.s32 1, %s27
    $region7: #{simple_composition_forward.3} parent=1 // loop_footer_branch
      %26 = sbr.rel target = $region3
    $region8: #{simple_composition_forward.3} parent=1 // loop_exit
      _
    %1527 = vsyncpa [#allocation3], 1
    %s1528 = scalar_lea.sflag [#allocation3], 1
    %1529 = vsyncpa %s1528, 1

</llo_original>
